<compile_context>
chip_gen: v7x
topology: tpu7x:2x2x1
jax: 0.10.0
libtpu: 0.0.40
codegen_flags: <defaults>
</compile_context>

<pallas_src>
import jax
import jax.numpy as jnp
from jax.experimental import pallas as pl
from jax.experimental.pallas import tpu as pltpu


_VMEM = pl.BlockSpec(memory_space=pltpu.MemorySpace.VMEM)


# ---------------------------------------------------------------------------
# Pallas kernels
# ---------------------------------------------------------------------------

def _conv_relu_pool_kernel(p_ref, w_ref, b_ref, o_ref):
    """Fused 3x3 conv + bias + ReLU + 2x2 max-pool.

    p_ref: (4, K, M)  corner-major im2col patches, K = 9*Cin, M = B*Hp*Wp
    w_ref: (Cout, K)  conv weight, rows match patch row order (ci, kh, kw)
    b_ref: (Cout, 1)  bias
    o_ref: (Cout, M)  pooled output, lane-dense along M
    """
    w = w_ref[...]
    b = b_ref[...]
    out = None
    for c in range(4):                      # 4 corners of each 2x2 pool window
        y = jnp.dot(w, p_ref[c], preferred_element_type=jnp.float32) + b
        out = y if out is None else jnp.maximum(out, y)
    # relu(maxpool(.)) == maxpool(relu(.)) -> apply ReLU once after the max.
    o_ref[...] = jnp.maximum(out, 0.0).astype(o_ref.dtype)


def _conv_head_kernel(p_ref, w_ref, b_ref, mean_ref, w1_ref, b1_ref,
                      w2_ref, b2_ref, o_ref):
    """Fused 3x3 conv + global spatial mean + Linear -> ReLU -> Linear.

    p_ref:    (K, M)      im2col patches of the conv3 input, M = B*Ho*Wo
    w_ref:    (64, K)     conv3 weight
    b_ref:    (64, 1)     conv3 bias
    mean_ref: (M, B)      per-batch averaging matrix (1/S in valid positions)
    w1_ref:   (32, 64), b1_ref: (32, 1)
    w2_ref:   (out, 32), b2_ref: (out, 1)
    o_ref:    (out, B)
    """
    y = jnp.dot(w_ref[...], p_ref[...],
                preferred_element_type=jnp.float32) + b_ref[...]        # (64, M)
    feat = jnp.dot(y, mean_ref[...],
                   preferred_element_type=jnp.float32)                  # (64, B)
    h = jnp.dot(w1_ref[...], feat,
                preferred_element_type=jnp.float32) + b1_ref[...]       # (32, B)
    h = jnp.maximum(h, 0.0)
    o_ref[...] = (jnp.dot(w2_ref[...], h,
                          preferred_element_type=jnp.float32)
                  + b2_ref[...]).astype(o_ref.dtype)                    # (out, B)


# ---------------------------------------------------------------------------
# Layer wrappers (glue: zero-copy weight views + im2col slicing; compute in
# the pallas_calls above)
# ---------------------------------------------------------------------------

def conv_relu_pool(x_cbhw, w_oihw, bias):
    """Valid 3x3 conv + ReLU + MaxPool2d(2) (floor mode), fused in one kernel.

    x_cbhw: (Cin, B, H, W)  channels-major feature map
    returns (Cout, B, Hp, Wp)
    """
    C, B, H, W = x_cbhw.shape
    Cout = w_oihw.shape[0]
    Ho, Wo = H - 2, W - 2
    Hp, Wp = Ho // 2, Wo // 2           # floor mode: trailing odd row/col dropped
    Q = B * Hp * Wp
    K = 9 * C

    # Corner-major im2col: for each of the 4 corners of a 2x2 pool window,
    # gather the 9 conv taps.  Row order of K is (ci, kh, kw), matching the
    # zero-copy reshape of the OIHW weight below.
    corners = []
    for dh in range(2):
        for dw in range(2):
            taps = [x_cbhw[:, :, dh + kh: dh + kh + 2 * Hp: 2,
                              dw + kw: dw + kw + 2 * Wp: 2]
                    for kh in range(3) for kw in range(3)]
            corners.append(jnp.stack(taps, axis=1).reshape(K, Q))
    patches = jnp.stack(corners, axis=0)            # (4, K, Q)

    wmat = w_oihw.reshape(Cout, C * 9)              # zero-copy view of OIHW

    out = pl.pallas_call(
        _conv_relu_pool_kernel,
        out_shape=jax.ShapeDtypeStruct((Cout, Q), jnp.float32),
        in_specs=[_VMEM, _VMEM, _VMEM],
        out_specs=_VMEM,
    )(patches, wmat, bias.reshape(Cout, 1))

    return out.reshape(Cout, B, Hp, Wp)


def conv_head(x_cbhw, w_oihw, bias, w1, b1, w2, b2):
    """Valid 3x3 conv + torch.mean(dim=(2,3)) + Linear->ReLU->Linear, fused."""
    C, B, H, W = x_cbhw.shape
    Cout = w_oihw.shape[0]
    Ho, Wo = H - 2, W - 2
    S = Ho * Wo
    M = B * S
    K = 9 * C

    taps = [x_cbhw[:, :, kh:kh + Ho, kw:kw + Wo]
            for kh in range(3) for kw in range(3)]
    patches = jnp.stack(taps, axis=1).reshape(K, M)     # (K, M), cols (b, h, w)
    wmat = w_oihw.reshape(Cout, C * 9)

    # Per-batch spatial averaging as a matmul: column b has 1/S on its rows.
    mean_mat = jnp.repeat(jnp.eye(B, dtype=jnp.float32), S, axis=0) / S  # (M, B)

    out_dim = w2.shape[0]
    out = pl.pallas_call(
        _conv_head_kernel,
        out_shape=jax.ShapeDtypeStruct((out_dim, B), jnp.float32),
        in_specs=[_VMEM] * 8,
        out_specs=_VMEM,
    )(patches, wmat, bias.reshape(Cout, 1), mean_mat,
      w1, b1.reshape(-1, 1), w2, b2.reshape(-1, 1))
    return out                                           # (out_dim, B)


def basic_cnn_forward(x_nchw, p):
    # Channels-major dataflow: (C, B, H, W) so the flattened B*H*W axis lands
    # on the lane dim inside every kernel (lane-dense stores).
    x = jnp.transpose(x_nchw, (1, 0, 2, 3))
    x = conv_relu_pool(x, p["conv1_w"], p["conv1_b"])    # (16, B, 15, 15)
    x = conv_relu_pool(x, p["conv2_w"], p["conv2_b"])    # (32, B, 6, 6)
    y = conv_head(x, p["conv3_w"], p["conv3_b"],
                  p["lin1_w"], p["lin1_b"], p["lin2_w"], p["lin2_b"])  # (out, B)
    return y.T                                           # (B, out)


# ---------------------------------------------------------------------------
# Deterministic parameter init (shapes per BasicCNN.__init__; synthetic values)
# Linear weights kept in torch (out, in) layout == kernel-native layout.
# ---------------------------------------------------------------------------

def init_params(key, in_channels, out_dim):
    def uni(k, shape, fan_in):
        bound = 1.0 / (fan_in ** 0.5)
        return jax.random.uniform(k, shape, jnp.float32, -bound, bound)

    ks = jax.random.split(key, 10)
    p = {}
    p["conv1_w"] = uni(ks[0], (16, in_channels, 3, 3), in_channels * 9)
    p["conv1_b"] = uni(ks[1], (16,), in_channels * 9)
    p["conv2_w"] = uni(ks[2], (32, 16, 3, 3), 16 * 9)
    p["conv2_b"] = uni(ks[3], (32,), 16 * 9)
    p["conv3_w"] = uni(ks[4], (64, 32, 3, 3), 32 * 9)
    p["conv3_b"] = uni(ks[5], (64,), 32 * 9)
    p["lin1_w"] = uni(ks[6], (32, 64), 64)      # torch layout: (out, in)
    p["lin1_b"] = uni(ks[7], (32,), 64)
    p["lin2_w"] = uni(ks[8], (out_dim, 32), 32)
    p["lin2_b"] = uni(ks[9], (out_dim,), 32)
    return p


# ---------------------------------------------------------------------------
# Pure-JAX reference (semantic check), highest precision so the tolerance can
# be tightened well below 5e-2.
# ---------------------------------------------------------------------------

def reference_forward(x_nchw, p):
    hp = jax.lax.Precision.HIGHEST

    def conv(x, w, b):
        y = jax.lax.conv_general_dilated(
            x, w, (1, 1), "VALID",
            dimension_numbers=("NCHW", "OIHW", "NCHW"), precision=hp)
        return y + b[None, :, None, None]

    def pool(x):
        return jax.lax.reduce_window(x, -jnp.inf, jax.lax.max,
                                     (1, 1, 2, 2), (1, 1, 2, 2), "VALID")

    x = jax.nn.relu(conv(x_nchw, p["conv1_w"], p["conv1_b"]))
    x = pool(x)
    x = jax.nn.relu(conv(x, p["conv2_w"], p["conv2_b"]))
    x = pool(x)
    x = conv(x, p["conv3_w"], p["conv3_b"])
    x = jnp.mean(x, axis=(2, 3))
    x = jax.nn.relu(jnp.dot(x, p["lin1_w"].T, precision=hp) + p["lin1_b"])
    return jnp.dot(x, p["lin2_w"].T, precision=hp) + p["lin2_b"]


if __name__ == "__main__":
    key = jax.random.PRNGKey(0)
    kx, kp = jax.random.split(key)

    # Spatial must be >= 18 to survive the three valid convs + two pools; 32
    # gives the canonical 32->30->15->13->6->4 pipeline.
    B, C, H, W = 2, 4, 32, 32
    out_dim = 10

    x = jax.random.normal(kx, (B, C, H, W), jnp.float32)
    params = init_params(kp, C, out_dim)

    y = jax.jit(basic_cnn_forward)(x, params)
    y = jax.block_until_ready(y)
    assert y.shape == (B, out_dim)

    y_ref = reference_forward(x, params)
    max_err = float(jnp.max(jnp.abs(y - y_ref)))
    # Tightened from 5e-2: everything is f32 with f32 accumulation, so any
    # layout/indexing regression (O(1e-1) error) is caught immediately.
    if max_err > 1e-3:
        raise AssertionError(f"Pallas output mismatch vs reference: max abs err {max_err}")

    print("KERNEL_OK")
</pallas_src>

<mosaic_0001>
module attributes {stable_mosaic.version = 11 : i64} {
  func.func @_conv_relu_pool_kernel(%arg0: memref<4x36x450xf32, #tpu.memory_space<vmem>>, %arg1: memref<16x36xf32, #tpu.memory_space<vmem>>, %arg2: memref<16x1xf32, #tpu.memory_space<vmem>>, %arg3: memref<16x450xf32, #tpu.memory_space<vmem>>) attributes {dimension_semantics = [], scalar_prefetch = 0 : i64, scratch_operands = 0 : i64, tpu.core_type = #tpu.core_type<tc>} {
    %c0 = arith.constant 0 : index
    %c0_0 = arith.constant 0 : index
    %0 = vector.load %arg1[%c0, %c0_0] : memref<16x36xf32, #tpu.memory_space<vmem>>, vector<16x36xf32>
    %c0_1 = arith.constant 0 : index
    %c0_2 = arith.constant 0 : index
    %1 = vector.load %arg2[%c0_1, %c0_2] : memref<16x1xf32, #tpu.memory_space<vmem>>, vector<16x1xf32>
    %c0_3 = arith.constant 0 : index
    %c0_4 = arith.constant 0 : index
    %c0_5 = arith.constant 0 : index
    %2 = vector.load %arg0[%c0_3, %c0_4, %c0_5] : memref<4x36x450xf32, #tpu.memory_space<vmem>>, vector<1x36x450xf32>
    %3 = vector.shape_cast %2 : vector<1x36x450xf32> to vector<36x450xf32>
    %cst = arith.constant dense<0.000000e+00> : vector<16x450xf32>
    %4 = tpu.matmul %0, %3, %cst {dimension_numbers = #tpu.dot_dimension_numbers<[1], [0], [0], [1], [0, 0, 1, 1], [], []>} : vector<16x36xf32>, vector<36x450xf32>, vector<16x450xf32> -> vector<16x450xf32>
    %5 = vector.broadcast %1 : vector<16x1xf32> to vector<16x450xf32>
    %6 = arith.addf %4, %5 : vector<16x450xf32>
    %c1 = arith.constant 1 : index
    %c0_6 = arith.constant 0 : index
    %c0_7 = arith.constant 0 : index
    %7 = vector.load %arg0[%c1, %c0_6, %c0_7] : memref<4x36x450xf32, #tpu.memory_space<vmem>>, vector<1x36x450xf32>
    %8 = vector.shape_cast %7 : vector<1x36x450xf32> to vector<36x450xf32>
    %cst_8 = arith.constant dense<0.000000e+00> : vector<16x450xf32>
    %9 = tpu.matmul %0, %8, %cst_8 {dimension_numbers = #tpu.dot_dimension_numbers<[1], [0], [0], [1], [0, 0, 1, 1], [], []>} : vector<16x36xf32>, vector<36x450xf32>, vector<16x450xf32> -> vector<16x450xf32>
    %10 = vector.broadcast %1 : vector<16x1xf32> to vector<16x450xf32>
    %11 = arith.addf %9, %10 : vector<16x450xf32>
    %12 = arith.maximumf %6, %11 : vector<16x450xf32>
    %c2 = arith.constant 2 : index
    %c0_9 = arith.constant 0 : index
    %c0_10 = arith.constant 0 : index
    %13 = vector.load %arg0[%c2, %c0_9, %c0_10] : memref<4x36x450xf32, #tpu.memory_space<vmem>>, vector<1x36x450xf32>
    %14 = vector.shape_cast %13 : vector<1x36x450xf32> to vector<36x450xf32>
    %cst_11 = arith.constant dense<0.000000e+00> : vector<16x450xf32>
    %15 = tpu.matmul %0, %14, %cst_11 {dimension_numbers = #tpu.dot_dimension_numbers<[1], [0], [0], [1], [0, 0, 1, 1], [], []>} : vector<16x36xf32>, vector<36x450xf32>, vector<16x450xf32> -> vector<16x450xf32>
    %16 = vector.broadcast %1 : vector<16x1xf32> to vector<16x450xf32>
    %17 = arith.addf %15, %16 : vector<16x450xf32>
    %18 = arith.maximumf %12, %17 : vector<16x450xf32>
    %c3 = arith.constant 3 : index
    %c0_12 = arith.constant 0 : index
    %c0_13 = arith.constant 0 : index
    %19 = vector.load %arg0[%c3, %c0_12, %c0_13] : memref<4x36x450xf32, #tpu.memory_space<vmem>>, vector<1x36x450xf32>
    %20 = vector.shape_cast %19 : vector<1x36x450xf32> to vector<36x450xf32>
    %cst_14 = arith.constant dense<0.000000e+00> : vector<16x450xf32>
    %21 = tpu.matmul %0, %20, %cst_14 {dimension_numbers = #tpu.dot_dimension_numbers<[1], [0], [0], [1], [0, 0, 1, 1], [], []>} : vector<16x36xf32>, vector<36x450xf32>, vector<16x450xf32> -> vector<16x450xf32>
    %22 = vector.broadcast %1 : vector<16x1xf32> to vector<16x450xf32>
    %23 = arith.addf %21, %22 : vector<16x450xf32>
    %24 = arith.maximumf %18, %23 : vector<16x450xf32>
    %cst_15 = arith.constant 0.000000e+00 : f32
    %25 = vector.broadcast %cst_15 : f32 to vector<16x450xf32>
    %26 = arith.maximumf %24, %25 : vector<16x450xf32>
    %c0_16 = arith.constant 0 : index
    %c0_17 = arith.constant 0 : index
    %27 = vector.load %arg3[%c0_16, %c0_17] : memref<16x450xf32, #tpu.memory_space<vmem>>, vector<16x450xf32>
    tpu.vector_store %arg3[%c0_16, %c0_17], %26 {strides = array<i32>} : memref<16x450xf32, #tpu.memory_space<vmem>>, vector<16x450xf32>,
    return
  }
}

module attributes {stable_mosaic.version = 11 : i64} {
  func.func @_conv_relu_pool_kernel(%arg0: memref<4x144x72xf32, #tpu.memory_space<vmem>>, %arg1: memref<32x144xf32, #tpu.memory_space<vmem>>, %arg2: memref<32x1xf32, #tpu.memory_space<vmem>>, %arg3: memref<32x72xf32, #tpu.memory_space<vmem>>) attributes {dimension_semantics = [], scalar_prefetch = 0 : i64, scratch_operands = 0 : i64, tpu.core_type = #tpu.core_type<tc>} {
    %c0 = arith.constant 0 : index
    %c0_0 = arith.constant 0 : index
    %0 = vector.load %arg1[%c0, %c0_0] : memref<32x144xf32, #tpu.memory_space<vmem>>, vector<32x144xf32>
    %c0_1 = arith.constant 0 : index
    %c0_2 = arith.constant 0 : index
    %1 = vector.load %arg2[%c0_1, %c0_2] : memref<32x1xf32, #tpu.memory_space<vmem>>, vector<32x1xf32>
    %c0_3 = arith.constant 0 : index
    %c0_4 = arith.constant 0 : index
    %c0_5 = arith.constant 0 : index
    %2 = vector.load %arg0[%c0_3, %c0_4, %c0_5] : memref<4x144x72xf32, #tpu.memory_space<vmem>>, vector<1x144x72xf32>
    %3 = vector.shape_cast %2 : vector<1x144x72xf32> to vector<144x72xf32>
    %cst = arith.constant dense<0.000000e+00> : vector<32x72xf32>
    %4 = tpu.matmul %0, %3, %cst {dimension_numbers = #tpu.dot_dimension_numbers<[1], [0], [0], [1], [0, 0, 1, 1], [], []>} : vector<32x144xf32>, vector<144x72xf32>, vector<32x72xf32> -> vector<32x72xf32>
    %5 = vector.broadcast %1 : vector<32x1xf32> to vector<32x72xf32>
    %6 = arith.addf %4, %5 : vector<32x72xf32>
    %c1 = arith.constant 1 : index
    %c0_6 = arith.constant 0 : index
    %c0_7 = arith.constant 0 : index
    %7 = vector.load %arg0[%c1, %c0_6, %c0_7] : memref<4x144x72xf32, #tpu.memory_space<vmem>>, vector<1x144x72xf32>
    %8 = vector.shape_cast %7 : vector<1x144x72xf32> to vector<144x72xf32>
    %cst_8 = arith.constant dense<0.000000e+00> : vector<32x72xf32>
    %9 = tpu.matmul %0, %8, %cst_8 {dimension_numbers = #tpu.dot_dimension_numbers<[1], [0], [0], [1], [0, 0, 1, 1], [], []>} : vector<32x144xf32>, vector<144x72xf32>, vector<32x72xf32> -> vector<32x72xf32>
    %10 = vector.broadcast %1 : vector<32x1xf32> to vector<32x72xf32>
    %11 = arith.addf %9, %10 : vector<32x72xf32>
    %12 = arith.maximumf %6, %11 : vector<32x72xf32>
    %c2 = arith.constant 2 : index
    %c0_9 = arith.constant 0 : index
    %c0_10 = arith.constant 0 : index
    %13 = vector.load %arg0[%c2, %c0_9, %c0_10] : memref<4x144x72xf32, #tpu.memory_space<vmem>>, vector<1x144x72xf32>
    %14 = vector.shape_cast %13 : vector<1x144x72xf32> to vector<144x72xf32>
    %cst_11 = arith.constant dense<0.000000e+00> : vector<32x72xf32>
    %15 = tpu.matmul %0, %14, %cst_11 {dimension_numbers = #tpu.dot_dimension_numbers<[1], [0], [0], [1], [0, 0, 1, 1], [], []>} : vector<32x144xf32>, vector<144x72xf32>, vector<32x72xf32> -> vector<32x72xf32>
    %16 = vector.broadcast %1 : vector<32x1xf32> to vector<32x72xf32>
    %17 = arith.addf %15, %16 : vector<32x72xf32>
    %18 = arith.maximumf %12, %17 : vector<32x72xf32>
    %c3 = arith.constant 3 : index
    %c0_12 = arith.constant 0 : index
    %c0_13 = arith.constant 0 : index
    %19 = vector.load %arg0[%c3, %c0_12, %c0_13] : memref<4x144x72xf32, #tpu.memory_space<vmem>>, vector<1x144x72xf32>
    %20 = vector.shape_cast %19 : vector<1x144x72xf32> to vector<144x72xf32>
    %cst_14 = arith.constant dense<0.000000e+00> : vector<32x72xf32>
    %21 = tpu.matmul %0, %20, %cst_14 {dimension_numbers = #tpu.dot_dimension_numbers<[1], [0], [0], [1], [0, 0, 1, 1], [], []>} : vector<32x144xf32>, vector<144x72xf32>, vector<32x72xf32> -> vector<32x72xf32>
    %22 = vector.broadcast %1 : vector<32x1xf32> to vector<32x72xf32>
    %23 = arith.addf %21, %22 : vector<32x72xf32>
    %24 = arith.maximumf %18, %23 : vector<32x72xf32>
    %cst_15 = arith.constant 0.000000e+00 : f32
    %25 = vector.broadcast %cst_15 : f32 to vector<32x72xf32>
    %26 = arith.maximumf %24, %25 : vector<32x72xf32>
    %c0_16 = arith.constant 0 : index
    %c0_17 = arith.constant 0 : index
    %27 = vector.load %arg3[%c0_16, %c0_17] : memref<32x72xf32, #tpu.memory_space<vmem>>, vector<32x72xf32>
    tpu.vector_store %arg3[%c0_16, %c0_17], %26 {strides = array<i32>} : memref<32x72xf32, #tpu.memory_space<vmem>>, vector<32x72xf32>,
    return
  }
}

module attributes {stable_mosaic.version = 11 : i64} {
  func.func @_conv_head_kernel(%arg0: memref<288x32xf32, #tpu.memory_space<vmem>>, %arg1: memref<64x288xf32, #tpu.memory_space<vmem>>, %arg2: memref<64x1xf32, #tpu.memory_space<vmem>>, %arg3: memref<32x2xf32, #tpu.memory_space<vmem>>, %arg4: memref<32x64xf32, #tpu.memory_space<vmem>>, %arg5: memref<32x1xf32, #tpu.memory_space<vmem>>, %arg6: memref<10x32xf32, #tpu.memory_space<vmem>>, %arg7: memref<10x1xf32, #tpu.memory_space<vmem>>, %arg8: memref<10x2xf32, #tpu.memory_space<vmem>>) attributes {dimension_semantics = [], scalar_prefetch = 0 : i64, scratch_operands = 0 : i64, tpu.core_type = #tpu.core_type<tc>} {
    %c0 = arith.constant 0 : index
    %c0_0 = arith.constant 0 : index
    %0 = vector.load %arg1[%c0, %c0_0] : memref<64x288xf32, #tpu.memory_space<vmem>>, vector<64x288xf32>
    %c0_1 = arith.constant 0 : index
    %c0_2 = arith.constant 0 : index
    %1 = vector.load %arg0[%c0_1, %c0_2] : memref<288x32xf32, #tpu.memory_space<vmem>>, vector<288x32xf32>
    %cst = arith.constant dense<0.000000e+00> : vector<64x32xf32>
    %2 = tpu.matmul %0, %1, %cst {dimension_numbers = #tpu.dot_dimension_numbers<[1], [0], [0], [1], [0, 0, 1, 1], [], []>} : vector<64x288xf32>, vector<288x32xf32>, vector<64x32xf32> -> vector<64x32xf32>
    %c0_3 = arith.constant 0 : index
    %c0_4 = arith.constant 0 : index
    %3 = vector.load %arg2[%c0_3, %c0_4] : memref<64x1xf32, #tpu.memory_space<vmem>>, vector<64x1xf32>
    %4 = vector.broadcast %3 : vector<64x1xf32> to vector<64x32xf32>
    %5 = arith.addf %2, %4 : vector<64x32xf32>
    %c0_5 = arith.constant 0 : index
    %c0_6 = arith.constant 0 : index
    %6 = vector.load %arg3[%c0_5, %c0_6] : memref<32x2xf32, #tpu.memory_space<vmem>>, vector<32x2xf32>
    %cst_7 = arith.constant dense<0.000000e+00> : vector<64x2xf32>
    %7 = tpu.matmul %5, %6, %cst_7 {dimension_numbers = #tpu.dot_dimension_numbers<[1], [0], [0], [1], [0, 0, 1, 1], [], []>} : vector<64x32xf32>, vector<32x2xf32>, vector<64x2xf32> -> vector<64x2xf32>
    %c0_8 = arith.constant 0 : index
    %c0_9 = arith.constant 0 : index
    %8 = vector.load %arg4[%c0_8, %c0_9] : memref<32x64xf32, #tpu.memory_space<vmem>>, vector<32x64xf32>
    %cst_10 = arith.constant dense<0.000000e+00> : vector<32x2xf32>
    %9 = tpu.matmul %8, %7, %cst_10 {dimension_numbers = #tpu.dot_dimension_numbers<[1], [0], [0], [1], [0, 0, 1, 1], [], []>} : vector<32x64xf32>, vector<64x2xf32>, vector<32x2xf32> -> vector<32x2xf32>
    %c0_11 = arith.constant 0 : index
    %c0_12 = arith.constant 0 : index
    %10 = vector.load %arg5[%c0_11, %c0_12] : memref<32x1xf32, #tpu.memory_space<vmem>>, vector<32x1xf32>
    %11 = vector.broadcast %10 : vector<32x1xf32> to vector<32x2xf32>
    %12 = arith.addf %9, %11 : vector<32x2xf32>
    %cst_13 = arith.constant 0.000000e+00 : f32
    %13 = vector.broadcast %cst_13 : f32 to vector<32x2xf32>
    %14 = arith.maximumf %12, %13 : vector<32x2xf32>
    %c0_14 = arith.constant 0 : index
    %c0_15 = arith.constant 0 : index
    %15 = vector.load %arg6[%c0_14, %c0_15] : memref<10x32xf32, #tpu.memory_space<vmem>>, vector<10x32xf32>
    %cst_16 = arith.constant dense<0.000000e+00> : vector<10x2xf32>
    %16 = tpu.matmul %15, %14, %cst_16 {dimension_numbers = #tpu.dot_dimension_numbers<[1], [0], [0], [1], [0, 0, 1, 1], [], []>} : vector<10x32xf32>, vector<32x2xf32>, vector<10x2xf32> -> vector<10x2xf32>
    %c0_17 = arith.constant 0 : index
    %c0_18 = arith.constant 0 : index
    %17 = vector.load %arg7[%c0_17, %c0_18] : memref<10x1xf32, #tpu.memory_space<vmem>>, vector<10x1xf32>
    %18 = vector.broadcast %17 : vector<10x1xf32> to vector<10x2xf32>
    %19 = arith.addf %16, %18 : vector<10x2xf32>
    %c0_19 = arith.constant 0 : index
    %c0_20 = arith.constant 0 : index
    %20 = vector.load %arg8[%c0_19, %c0_20] : memref<10x2xf32, #tpu.memory_space<vmem>>, vector<10x2xf32>
    tpu.vector_store %arg8[%c0_19, %c0_20], %19 {strides = array<i32>} : memref<10x2xf32, #tpu.memory_space<vmem>>, vector<10x2xf32>,
    return
  }
}

</mosaic_0001>

<llo_original>
// kernel: basic_cnn_forward.3
$region0: #{basic_cnn_forward.3}
  #allocation0 [shape = 'u32[]', space=smem, size = 0x4, offset = 0x4, fixed_abs, tag = 'smem constant byte address 0x4 - core index']
  #allocation1 [shape = 'u32[144,128]{1,0:T(1,128)}', space=vmem, size = 0x12000, scoped, tag = 'internal scratch']
  %s0 = inlined_call_operand.vmem [shape: f32[4,36,450], index: 0, kind: input, shape index: {}]
  %s1 = inlined_call_operand.vmem [shape: f32[16,36], index: 1, kind: input, shape index: {}]
  %s2 = inlined_call_operand.vmem [shape: f32[16,1], index: 2, kind: input, shape index: {}]
  %s3 = inlined_call_operand.vmem [shape: f32[16,450], index: 3, kind: output, shape index: {}]
  %s4 = sld [smem:[#allocation0]]
  $region22: #{basic_cnn_forward.3} parent=0
    _
  %s6 = ssub.s32 1, %s4
  %s7 = scalar_select 0, %s6, %s4
  // Predicated region
  $region2: #{basic_cnn_forward.3} parent=0 // pred_check
    _
  $region3: #{basic_cnn_forward.3} parent=0 // pred_check_branch
    %9 = sbr.rel (0) target = $region5
  $region4: #{basic_cnn_forward.3} parent=0 // pred_region
    _
  $region5: #{basic_cnn_forward.3} parent=0 // pred_fallthru
    _
  // Predicated region
  $region6: #{basic_cnn_forward.3} parent=0 // pred_check
    _
  $region7: #{basic_cnn_forward.3} parent=0 // pred_check_branch
    %11 = sbr.rel (0) target = $region9
  $region8: #{basic_cnn_forward.3} parent=0 // pred_region
    _
  $region9: #{basic_cnn_forward.3} parent=0 // pred_fallthru
    _
  // Predicated region
  $region10: #{basic_cnn_forward.3} parent=0 // pred_check
    _
  $region11: #{basic_cnn_forward.3} parent=0 // pred_check_branch
    %13 = sbr.rel (0) target = $region13
  $region12: #{basic_cnn_forward.3} parent=0 // pred_region
    _
  $region13: #{basic_cnn_forward.3} parent=0 // pred_fallthru
    _
  %v14 = vld [vmem:[%s1] sm:$0xff]
  %v15 = vld [vmem:[%s1 + $0x8] sm:$0xff]
  %v16 = vld [vmem:[%s2] sm:$0xff]
  %v17 = vld [vmem:[%s2 + $0x8] sm:$0xff]
  %v18 = vld [vmem:[%s0] sm:$0xff]
  %v19 = vld [vmem:[%s0 + $0x8] sm:$0xff]
  %v20 = vld [vmem:[%s0 + $0x10] sm:$0xff]
  %v21 = vld [vmem:[%s0 + $0x18] sm:$0xff]
  %v22 = vld [vmem:[%s0 + $0x20] sm:$0xff]
  %v23 = vld [vmem:[%s0 + $0x28] sm:$0xff]
  %v24 = vld [vmem:[%s0 + $0x30] sm:$0xff]
  %v25 = vld [vmem:[%s0 + $0x38] sm:$0xff]
  %v26 = vld [vmem:[%s0 + $0x40] sm:$0xff]
  %v27 = vld [vmem:[%s0 + $0x48] sm:$0xff]
  %v28 = vld [vmem:[%s0 + $0x50] sm:$0xff]
  %v29 = vld [vmem:[%s0 + $0x58] sm:$0xff]
  %v30 = vld [vmem:[%s0 + $0x60] sm:$0xff]
  %v31 = vld [vmem:[%s0 + $0x68] sm:$0xff]
  %v32 = vld [vmem:[%s0 + $0x70] sm:$0xff]
  %v33 = vld [vmem:[%s0 + $0x78] sm:$0xff]
  %v34 = vld [vmem:[%s0 + $0x80] sm:$0xf]
  %v35 = vld [vmem:[%s0 + $0x88] sm:$0xf]
  %v36 = vld [vmem:[%s0 + $0x90] sm:$0xf]
  %v37 = vld [vmem:[%s0 + $0x98] sm:$0xf]
  %39 = vset.pattern.permute.xlu0 0
  %40 = vperm.xlu0 %39, %v16
  %v41 = vpop.permute.xlu0 %40
  %44 = vset.pattern.permute.xlu0 0
  %45 = vperm.xlu0 %44, %v17
  %v46 = vpop.permute.xlu0 %45
  %vm48 = vcmask 293888
  %v50 = vsel %vm48, %v14, 0
  %v53 = vsel %vm48, %v15, 0
  %vm55 = vcmask 1043456
  %v57 = vsel %vm55, %v34, 0
  %v60 = vsel %vm55, %v35, 0
  %v63 = vsel %vm55, %v36, 0
  %v66 = vsel %vm55, %v37, 0
  %68 = vmatprep.subr.mxu0 %v19
  %69 = vmatpush1.msra.mxu0 %v18
  %70 = vmatprep.subr.mxu0 %v23
  %71 = vmatpush1.msra.mxu0 %v22
  %72 = vmatprep.subr.mxu0 %v27
  %73 = vmatpush1.msra.mxu0 %v26
  %74 = vmatprep.subr.mxu0 %v31
  %75 = vmatpush1.msra.mxu0 %v30
  %76 = vmatprep.subr.mxu0 %v60
  %77 = vmatpush1.msra.mxu0 %v57
  %78 = vmatprep.subr.mxu0 0.0
  %79 = vmatpush1.msra.mxu0 0.0
  %80 = vmatprep.subr.mxu0 0.0
  %81 = vmatpush1.msra.mxu0 0.0
  %82 = vmatprep.subr.mxu0 0.0
  %83 = vmatpush1.msra.mxu0 0.0
  %84 = vmatprep.subr.mxu0 0.0
  %85 = vmatpush1.msra.mxu0 0.0
  %86 = vmatprep.subr.mxu0 0.0
  %87 = vmatpush1.msra.mxu0 0.0
  %88 = vmatprep.subr.mxu0 0.0
  %89 = vmatpush1.msra.mxu0 0.0
  %90 = vmatprep.subr.mxu0 0.0
  %91 = vmatpush1.msra.mxu0 0.0
  %92 = vmatprep.subr.mxu0 0.0
  %93 = vmatpush1.msra.mxu0 0.0
  %94 = vmatprep.subr.mxu0 0.0
  %95 = vmatpush1.msra.mxu0 0.0
  %96 = vmatprep.subr.mxu0 0.0
  %97 = vmatpush1.msra.mxu0 0.0
  %98 = vmatprep.subr.mxu0 0.0
  %99 = vmatpush1.msra.mxu0 0.0
  %100 = vmatprep.subr.mxu0 0.0
  %101 = vmatpush1.msra.mxu0 0.0
  %102 = vmatprep.subr.mxu0 0.0
  %103 = vmatpush1.msra.mxu0 0.0
  %104 = vmatprep.subr.mxu0 0.0
  %105 = vmatpush1.msra.mxu0 0.0
  %106 = vmatprep.subr.mxu0 0.0
  %107 = vmatpush1.msra.mxu0 0.0
  %108 = vmatprep.subr.mxu0 0.0
  %109 = vmatpush1.msra.mxu0 0.0
  %110 = vmatprep.subr.mxu0 0.0
  %111 = vmatpush1.msra.mxu0 0.0
  %112 = vmatprep.subr.mxu0 0.0
  %113 = vmatpush1.msra.mxu0 0.0
  %114 = vmatprep.subr.mxu0 0.0
  %115 = vmatpush1.msra.mxu0 0.0
  %116 = vmatprep.subr.mxu0 0.0
  %117 = vmatpush1.msra.mxu0 0.0
  %118 = vmatprep.subr.mxu0 0.0
  %119 = vmatpush1.msra.mxu0 0.0
  %120 = vmatprep.subr.mxu0 0.0
  %121 = vmatpush1.msra.mxu0 0.0
  %122 = vmatprep.subr.mxu0 0.0
  %123 = vmatpush1.msra.mxu0 0.0
  %124 = vmatprep.subr.mxu0 0.0
  %125 = vmatpush1.msra.mxu0 0.0
  %126 = vmatprep.subr.mxu0 0.0
  %127 = vmatpush1.msra.mxu0 0.0
  %128 = vmatprep.subr.mxu0 0.0
  %129 = vmatpush1.msra.mxu0 0.0
  %130 = vmatprep.subr.mxu0 0.0
  %131 = vmatpush1.msra.mxu0 0.0
  %132 = vmatprep.mubr.f32.mxu0 0.0
  %133 = vmatmul.mubr.f32.gmra.mrb[0].mxu0 %v50
  %v134 = vpop.f32.mrb[0].mxu0
  %v135 = vadd.f32 %v41, %v134
  %v136 = vpop.f32.mrb[0].mxu0
  %v137 = vadd.f32 %v41, %v136
  %138 = vmatprep.mubr.f32.mxu0 0.0
  %139 = vmatmul.mubr.f32.gmra.mrb[0].mxu0 %v53
  %v140 = vpop.f32.mrb[0].mxu0
  %v141 = vadd.f32 %v46, %v140
  %v142 = vpop.f32.mrb[0].mxu0
  %v143 = vadd.f32 %v46, %v142
  %144 = vdwg.mxu0
  %145 = vmatprep.subr.mxu0 %v21
  %146 = vmatpush1.msra.mxu0 %v20
  %147 = vmatprep.subr.mxu0 %v25
  %148 = vmatpush1.msra.mxu0 %v24
  %149 = vmatprep.subr.mxu0 %v29
  %150 = vmatpush1.msra.mxu0 %v28
  %151 = vmatprep.subr.mxu0 %v33
  %152 = vmatpush1.msra.mxu0 %v32
  %153 = vmatprep.subr.mxu0 %v66
  %154 = vmatpush1.msra.mxu0 %v63
  %155 = vmatprep.subr.mxu0 0.0
  %156 = vmatpush1.msra.mxu0 0.0
  %157 = vmatprep.subr.mxu0 0.0
  %158 = vmatpush1.msra.mxu0 0.0
  %159 = vmatprep.subr.mxu0 0.0
  %160 = vmatpush1.msra.mxu0 0.0
  %161 = vmatprep.subr.mxu0 0.0
  %162 = vmatpush1.msra.mxu0 0.0
  %163 = vmatprep.subr.mxu0 0.0
  %164 = vmatpush1.msra.mxu0 0.0
  %165 = vmatprep.subr.mxu0 0.0
  %166 = vmatpush1.msra.mxu0 0.0
  %167 = vmatprep.subr.mxu0 0.0
  %168 = vmatpush1.msra.mxu0 0.0
  %169 = vmatprep.subr.mxu0 0.0
  %170 = vmatpush1.msra.mxu0 0.0
  %171 = vmatprep.subr.mxu0 0.0
  %172 = vmatpush1.msra.mxu0 0.0
  %173 = vmatprep.subr.mxu0 0.0
  %174 = vmatpush1.msra.mxu0 0.0
  %175 = vmatprep.subr.mxu0 0.0
  %176 = vmatpush1.msra.mxu0 0.0
  %177 = vmatprep.subr.mxu0 0.0
  %178 = vmatpush1.msra.mxu0 0.0
  %179 = vmatprep.subr.mxu0 0.0
  %180 = vmatpush1.msra.mxu0 0.0
  %181 = vmatprep.subr.mxu0 0.0
  %182 = vmatpush1.msra.mxu0 0.0
  %183 = vmatprep.subr.mxu0 0.0
  %184 = vmatpush1.msra.mxu0 0.0
  %185 = vmatprep.subr.mxu0 0.0
  %186 = vmatpush1.msra.mxu0 0.0
  %187 = vmatprep.subr.mxu0 0.0
  %188 = vmatpush1.msra.mxu0 0.0
  %189 = vmatprep.subr.mxu0 0.0
  %190 = vmatpush1.msra.mxu0 0.0
  %191 = vmatprep.subr.mxu0 0.0
  %192 = vmatpush1.msra.mxu0 0.0
  %193 = vmatprep.subr.mxu0 0.0
  %194 = vmatpush1.msra.mxu0 0.0
  %195 = vmatprep.subr.mxu0 0.0
  %196 = vmatpush1.msra.mxu0 0.0
  %197 = vmatprep.subr.mxu0 0.0
  %198 = vmatpush1.msra.mxu0 0.0
  %199 = vmatprep.subr.mxu0 0.0
  %200 = vmatpush1.msra.mxu0 0.0
  %201 = vmatprep.subr.mxu0 0.0
  %202 = vmatpush1.msra.mxu0 0.0
  %203 = vmatprep.subr.mxu0 0.0
  %204 = vmatpush1.msra.mxu0 0.0
  %205 = vmatprep.subr.mxu0 0.0
  %206 = vmatpush1.msra.mxu0 0.0
  %207 = vmatprep.subr.mxu0 0.0
  %208 = vmatpush1.msra.mxu0 0.0
  %209 = vmatprep.mubr.f32.mxu0 0.0
  %210 = vmatmul.mubr.f32.gmra.mrb[0].mxu0 %v50
  %v211 = vpop.f32.mrb[0].mxu0
  %v212 = vadd.f32 %v41, %v211
  %v213 = vpop.f32.mrb[0].mxu0
  %v214 = vadd.f32 %v41, %v213
  %215 = vmatprep.mubr.f32.mxu0 0.0
  %216 = vmatmul.mubr.f32.gmra.mrb[0].mxu0 %v53
  %v217 = vpop.f32.mrb[0].mxu0
  %v218 = vadd.f32 %v46, %v217
  %v219 = vpop.f32.mrb[0].mxu0
  %v220 = vadd.f32 %v46, %v219
  %221 = vdwg.mxu0
  %s222 = scalar_lea.vmem %s0, 160
  %v223 = vld [vmem:[%s222] sm:$0xff]
  %v224 = vld [vmem:[%s222 + $0x8] sm:$0xff]
  %v225 = vld [vmem:[%s222 + $0x10] sm:$0xff]
  %v226 = vld [vmem:[%s222 + $0x18] sm:$0xff]
  %v227 = vld [vmem:[%s222 + $0x20] sm:$0xff]
  %v228 = vld [vmem:[%s222 + $0x28] sm:$0xff]
  %v229 = vld [vmem:[%s222 + $0x30] sm:$0xff]
  %v230 = vld [vmem:[%s222 + $0x38] sm:$0xff]
  %v231 = vld [vmem:[%s222 + $0x40] sm:$0xff]
  %v232 = vld [vmem:[%s222 + $0x48] sm:$0xff]
  %v233 = vld [vmem:[%s222 + $0x50] sm:$0xff]
  %v234 = vld [vmem:[%s222 + $0x58] sm:$0xff]
  %v235 = vld [vmem:[%s222 + $0x60] sm:$0xff]
  %v236 = vld [vmem:[%s222 + $0x68] sm:$0xff]
  %v237 = vld [vmem:[%s222 + $0x70] sm:$0xff]
  %v238 = vld [vmem:[%s222 + $0x78] sm:$0xff]
  %v239 = vld [vmem:[%s222 + $0x80] sm:$0xf]
  %v240 = vld [vmem:[%s222 + $0x88] sm:$0xf]
  %v241 = vld [vmem:[%s222 + $0x90] sm:$0xf]
  %v242 = vld [vmem:[%s222 + $0x98] sm:$0xf]
  %v244 = vsel %vm55, %v239, 0
  %v247 = vsel %vm55, %v240, 0
  %v250 = vsel %vm55, %v241, 0
  %v253 = vsel %vm55, %v242, 0
  %255 = vmatprep.subr.mxu0 %v224
  %256 = vmatpush1.msra.mxu0 %v223
  %257 = vmatprep.subr.mxu0 %v228
  %258 = vmatpush1.msra.mxu0 %v227
  %259 = vmatprep.subr.mxu0 %v232
  %260 = vmatpush1.msra.mxu0 %v231
  %261 = vmatprep.subr.mxu0 %v236
  %262 = vmatpush1.msra.mxu0 %v235
  %263 = vmatprep.subr.mxu0 %v247
  %264 = vmatpush1.msra.mxu0 %v244
  %265 = vmatprep.subr.mxu0 0.0
  %266 = vmatpush1.msra.mxu0 0.0
  %267 = vmatprep.subr.mxu0 0.0
  %268 = vmatpush1.msra.mxu0 0.0
  %269 = vmatprep.subr.mxu0 0.0
  %270 = vmatpush1.msra.mxu0 0.0
  %271 = vmatprep.subr.mxu0 0.0
  %272 = vmatpush1.msra.mxu0 0.0
  %273 = vmatprep.subr.mxu0 0.0
  %274 = vmatpush1.msra.mxu0 0.0
  %275 = vmatprep.subr.mxu0 0.0
  %276 = vmatpush1.msra.mxu0 0.0
  %277 = vmatprep.subr.mxu0 0.0
  %278 = vmatpush1.msra.mxu0 0.0
  %279 = vmatprep.subr.mxu0 0.0
  %280 = vmatpush1.msra.mxu0 0.0
  %281 = vmatprep.subr.mxu0 0.0
  %282 = vmatpush1.msra.mxu0 0.0
  %283 = vmatprep.subr.mxu0 0.0
  %284 = vmatpush1.msra.mxu0 0.0
  %285 = vmatprep.subr.mxu0 0.0
  %286 = vmatpush1.msra.mxu0 0.0
  %287 = vmatprep.subr.mxu0 0.0
  %288 = vmatpush1.msra.mxu0 0.0
  %289 = vmatprep.subr.mxu0 0.0
  %290 = vmatpush1.msra.mxu0 0.0
  %291 = vmatprep.subr.mxu0 0.0
  %292 = vmatpush1.msra.mxu0 0.0
  %293 = vmatprep.subr.mxu0 0.0
  %294 = vmatpush1.msra.mxu0 0.0
  %295 = vmatprep.subr.mxu0 0.0
  %296 = vmatpush1.msra.mxu0 0.0
  %297 = vmatprep.subr.mxu0 0.0
  %298 = vmatpush1.msra.mxu0 0.0
  %299 = vmatprep.subr.mxu0 0.0
  %300 = vmatpush1.msra.mxu0 0.0
  %301 = vmatprep.subr.mxu0 0.0
  %302 = vmatpush1.msra.mxu0 0.0
  %303 = vmatprep.subr.mxu0 0.0
  %304 = vmatpush1.msra.mxu0 0.0
  %305 = vmatprep.subr.mxu0 0.0
  %306 = vmatpush1.msra.mxu0 0.0
  %307 = vmatprep.subr.mxu0 0.0
  %308 = vmatpush1.msra.mxu0 0.0
  %309 = vmatprep.subr.mxu0 0.0
  %310 = vmatpush1.msra.mxu0 0.0
  %311 = vmatprep.subr.mxu0 0.0
  %312 = vmatpush1.msra.mxu0 0.0
  %313 = vmatprep.subr.mxu0 0.0
  %314 = vmatpush1.msra.mxu0 0.0
  %315 = vmatprep.subr.mxu0 0.0
  %316 = vmatpush1.msra.mxu0 0.0
  %317 = vmatprep.subr.mxu0 0.0
  %318 = vmatpush1.msra.mxu0 0.0
  %319 = vmatprep.mubr.f32.mxu0 0.0
  %320 = vmatmul.mubr.f32.gmra.mrb[0].mxu0 %v50
  %v321 = vpop.f32.mrb[0].mxu0
  %v322 = vadd.f32 %v41, %v321
  %v323 = vpop.f32.mrb[0].mxu0
  %v324 = vadd.f32 %v41, %v323
  %325 = vmatprep.mubr.f32.mxu0 0.0
  %326 = vmatmul.mubr.f32.gmra.mrb[0].mxu0 %v53
  %v327 = vpop.f32.mrb[0].mxu0
  %v328 = vadd.f32 %v46, %v327
  %v329 = vpop.f32.mrb[0].mxu0
  %v330 = vadd.f32 %v46, %v329
  %331 = vdwg.mxu0
  %332 = vmatprep.subr.mxu0 %v226
  %333 = vmatpush1.msra.mxu0 %v225
  %334 = vmatprep.subr.mxu0 %v230
  %335 = vmatpush1.msra.mxu0 %v229
  %336 = vmatprep.subr.mxu0 %v234
  %337 = vmatpush1.msra.mxu0 %v233
  %338 = vmatprep.subr.mxu0 %v238
  %339 = vmatpush1.msra.mxu0 %v237
  %340 = vmatprep.subr.mxu0 %v253
  %341 = vmatpush1.msra.mxu0 %v250
  %342 = vmatprep.subr.mxu0 0.0
  %343 = vmatpush1.msra.mxu0 0.0
  %344 = vmatprep.subr.mxu0 0.0
  %345 = vmatpush1.msra.mxu0 0.0
  %346 = vmatprep.subr.mxu0 0.0
  %347 = vmatpush1.msra.mxu0 0.0
  %348 = vmatprep.subr.mxu0 0.0
  %349 = vmatpush1.msra.mxu0 0.0
  %350 = vmatprep.subr.mxu0 0.0
  %351 = vmatpush1.msra.mxu0 0.0
  %352 = vmatprep.subr.mxu0 0.0
  %353 = vmatpush1.msra.mxu0 0.0
  %354 = vmatprep.subr.mxu0 0.0
  %355 = vmatpush1.msra.mxu0 0.0
  %356 = vmatprep.subr.mxu0 0.0
  %357 = vmatpush1.msra.mxu0 0.0
  %358 = vmatprep.subr.mxu0 0.0
  %359 = vmatpush1.msra.mxu0 0.0
  %360 = vmatprep.subr.mxu0 0.0
  %361 = vmatpush1.msra.mxu0 0.0
  %362 = vmatprep.subr.mxu0 0.0
  %363 = vmatpush1.msra.mxu0 0.0
  %364 = vmatprep.subr.mxu0 0.0
  %365 = vmatpush1.msra.mxu0 0.0
  %366 = vmatprep.subr.mxu0 0.0
  %367 = vmatpush1.msra.mxu0 0.0
  %368 = vmatprep.subr.mxu0 0.0
  %369 = vmatpush1.msra.mxu0 0.0
  %370 = vmatprep.subr.mxu0 0.0
  %371 = vmatpush1.msra.mxu0 0.0
  %372 = vmatprep.subr.mxu0 0.0
  %373 = vmatpush1.msra.mxu0 0.0
  %374 = vmatprep.subr.mxu0 0.0
  %375 = vmatpush1.msra.mxu0 0.0
  %376 = vmatprep.subr.mxu0 0.0
  %377 = vmatpush1.msra.mxu0 0.0
  %378 = vmatprep.subr.mxu0 0.0
  %379 = vmatpush1.msra.mxu0 0.0
  %380 = vmatprep.subr.mxu0 0.0
  %381 = vmatpush1.msra.mxu0 0.0
  %382 = vmatprep.subr.mxu0 0.0
  %383 = vmatpush1.msra.mxu0 0.0
  %384 = vmatprep.subr.mxu0 0.0
  %385 = vmatpush1.msra.mxu0 0.0
  %386 = vmatprep.subr.mxu0 0.0
  %387 = vmatpush1.msra.mxu0 0.0
  %388 = vmatprep.subr.mxu0 0.0
  %389 = vmatpush1.msra.mxu0 0.0
  %390 = vmatprep.subr.mxu0 0.0
  %391 = vmatpush1.msra.mxu0 0.0
  %392 = vmatprep.subr.mxu0 0.0
  %393 = vmatpush1.msra.mxu0 0.0
  %394 = vmatprep.subr.mxu0 0.0
  %395 = vmatpush1.msra.mxu0 0.0
  %396 = vmatprep.mubr.f32.mxu0 0.0
  %397 = vmatmul.mubr.f32.gmra.mrb[0].mxu0 %v50
  %v398 = vpop.f32.mrb[0].mxu0
  %v399 = vadd.f32 %v41, %v398
  %v400 = vpop.f32.mrb[0].mxu0
  %v401 = vadd.f32 %v41, %v400
  %402 = vmatprep.mubr.f32.mxu0 0.0
  %403 = vmatmul.mubr.f32.gmra.mrb[0].mxu0 %v53
  %v404 = vpop.f32.mrb[0].mxu0
  %v405 = vadd.f32 %v46, %v404
  %v406 = vpop.f32.mrb[0].mxu0
  %v407 = vadd.f32 %v46, %v406
  %408 = vdwg.mxu0
  %v409 = vmax.f32 %v135, %v322
  %v410 = vmax.f32 %v137, %v324
  %v411 = vmax.f32 %v212, %v399
  %v412 = vmax.f32 %v214, %v401
  %v413 = vmax.f32 %v141, %v328
  %v414 = vmax.f32 %v143, %v330
  %v415 = vmax.f32 %v218, %v405
  %v416 = vmax.f32 %v220, %v407
  %s417 = scalar_lea.vmem %s0, 320
  %v418 = vld [vmem:[%s417] sm:$0xff]
  %v419 = vld [vmem:[%s417 + $0x8] sm:$0xff]
  %v420 = vld [vmem:[%s417 + $0x10] sm:$0xff]
  %v421 = vld [vmem:[%s417 + $0x18] sm:$0xff]
  %v422 = vld [vmem:[%s417 + $0x20] sm:$0xff]
  %v423 = vld [vmem:[%s417 + $0x28] sm:$0xff]
  %v424 = vld [vmem:[%s417 + $0x30] sm:$0xff]
  %v425 = vld [vmem:[%s417 + $0x38] sm:$0xff]
  %v426 = vld [vmem:[%s417 + $0x40] sm:$0xff]
  %v427 = vld [vmem:[%s417 + $0x48] sm:$0xff]
  %v428 = vld [vmem:[%s417 + $0x50] sm:$0xff]
  %v429 = vld [vmem:[%s417 + $0x58] sm:$0xff]
  %v430 = vld [vmem:[%s417 + $0x60] sm:$0xff]
  %v431 = vld [vmem:[%s417 + $0x68] sm:$0xff]
  %v432 = vld [vmem:[%s417 + $0x70] sm:$0xff]
  %v433 = vld [vmem:[%s417 + $0x78] sm:$0xff]
  %v434 = vld [vmem:[%s417 + $0x80] sm:$0xf]
  %v435 = vld [vmem:[%s417 + $0x88] sm:$0xf]
  %v436 = vld [vmem:[%s417 + $0x90] sm:$0xf]
  %v437 = vld [vmem:[%s417 + $0x98] sm:$0xf]
  %v439 = vsel %vm55, %v434, 0
  %v442 = vsel %vm55, %v435, 0
  %v445 = vsel %vm55, %v436, 0
  %v448 = vsel %vm55, %v437, 0
  %450 = vmatprep.subr.mxu0 %v419
  %451 = vmatpush1.msra.mxu0 %v418
  %452 = vmatprep.subr.mxu0 %v423
  %453 = vmatpush1.msra.mxu0 %v422
  %454 = vmatprep.subr.mxu0 %v427
  %455 = vmatpush1.msra.mxu0 %v426
  %456 = vmatprep.subr.mxu0 %v431
  %457 = vmatpush1.msra.mxu0 %v430
  %458 = vmatprep.subr.mxu0 %v442
  %459 = vmatpush1.msra.mxu0 %v439
  %460 = vmatprep.subr.mxu0 0.0
  %461 = vmatpush1.msra.mxu0 0.0
  %462 = vmatprep.subr.mxu0 0.0
  %463 = vmatpush1.msra.mxu0 0.0
  %464 = vmatprep.subr.mxu0 0.0
  %465 = vmatpush1.msra.mxu0 0.0
  %466 = vmatprep.subr.mxu0 0.0
  %467 = vmatpush1.msra.mxu0 0.0
  %468 = vmatprep.subr.mxu0 0.0
  %469 = vmatpush1.msra.mxu0 0.0
  %470 = vmatprep.subr.mxu0 0.0
  %471 = vmatpush1.msra.mxu0 0.0
  %472 = vmatprep.subr.mxu0 0.0
  %473 = vmatpush1.msra.mxu0 0.0
  %474 = vmatprep.subr.mxu0 0.0
  %475 = vmatpush1.msra.mxu0 0.0
  %476 = vmatprep.subr.mxu0 0.0
  %477 = vmatpush1.msra.mxu0 0.0
  %478 = vmatprep.subr.mxu0 0.0
  %479 = vmatpush1.msra.mxu0 0.0
  %480 = vmatprep.subr.mxu0 0.0
  %481 = vmatpush1.msra.mxu0 0.0
  %482 = vmatprep.subr.mxu0 0.0
  %483 = vmatpush1.msra.mxu0 0.0
  %484 = vmatprep.subr.mxu0 0.0
  %485 = vmatpush1.msra.mxu0 0.0
  %486 = vmatprep.subr.mxu0 0.0
  %487 = vmatpush1.msra.mxu0 0.0
  %488 = vmatprep.subr.mxu0 0.0
  %489 = vmatpush1.msra.mxu0 0.0
  %490 = vmatprep.subr.mxu0 0.0
  %491 = vmatpush1.msra.mxu0 0.0
  %492 = vmatprep.subr.mxu0 0.0
  %493 = vmatpush1.msra.mxu0 0.0
  %494 = vmatprep.subr.mxu0 0.0
  %495 = vmatpush1.msra.mxu0 0.0
  %496 = vmatprep.subr.mxu0 0.0
  %497 = vmatpush1.msra.mxu0 0.0
  %498 = vmatprep.subr.mxu0 0.0
  %499 = vmatpush1.msra.mxu0 0.0
  %500 = vmatprep.subr.mxu0 0.0
  %501 = vmatpush1.msra.mxu0 0.0
  %502 = vmatprep.subr.mxu0 0.0
  %503 = vmatpush1.msra.mxu0 0.0
  %504 = vmatprep.subr.mxu0 0.0
  %505 = vmatpush1.msra.mxu0 0.0
  %506 = vmatprep.subr.mxu0 0.0
  %507 = vmatpush1.msra.mxu0 0.0
  %508 = vmatprep.subr.mxu0 0.0
  %509 = vmatpush1.msra.mxu0 0.0
  %510 = vmatprep.subr.mxu0 0.0
  %511 = vmatpush1.msra.mxu0 0.0
  %512 = vmatprep.subr.mxu0 0.0
  %513 = vmatpush1.msra.mxu0 0.0
  %514 = vmatprep.mubr.f32.mxu0 0.0
  %515 = vmatmul.mubr.f32.gmra.mrb[0].mxu0 %v50
  %v516 = vpop.f32.mrb[0].mxu0
  %v517 = vadd.f32 %v41, %v516
  %v518 = vpop.f32.mrb[0].mxu0
  %v519 = vadd.f32 %v41, %v518
  %520 = vmatprep.mubr.f32.mxu0 0.0
  %521 = vmatmul.mubr.f32.gmra.mrb[0].mxu0 %v53
  %v522 = vpop.f32.mrb[0].mxu0
  %v523 = vadd.f32 %v46, %v522
  %v524 = vpop.f32.mrb[0].mxu0
  %v525 = vadd.f32 %v46, %v524
  %526 = vdwg.mxu0
  %527 = vmatprep.subr.mxu0 %v421
  %528 = vmatpush1.msra.mxu0 %v420
  %529 = vmatprep.subr.mxu0 %v425
  %530 = vmatpush1.msra.mxu0 %v424
  %531 = vmatprep.subr.mxu0 %v429
  %532 = vmatpush1.msra.mxu0 %v428
  %533 = vmatprep.subr.mxu0 %v433
  %534 = vmatpush1.msra.mxu0 %v432
  %535 = vmatprep.subr.mxu0 %v448
  %536 = vmatpush1.msra.mxu0 %v445
  %537 = vmatprep.subr.mxu0 0.0
  %538 = vmatpush1.msra.mxu0 0.0
  %539 = vmatprep.subr.mxu0 0.0
  %540 = vmatpush1.msra.mxu0 0.0
  %541 = vmatprep.subr.mxu0 0.0
  %542 = vmatpush1.msra.mxu0 0.0
  %543 = vmatprep.subr.mxu0 0.0
  %544 = vmatpush1.msra.mxu0 0.0
  %545 = vmatprep.subr.mxu0 0.0
  %546 = vmatpush1.msra.mxu0 0.0
  %547 = vmatprep.subr.mxu0 0.0
  %548 = vmatpush1.msra.mxu0 0.0
  %549 = vmatprep.subr.mxu0 0.0
  %550 = vmatpush1.msra.mxu0 0.0
  %551 = vmatprep.subr.mxu0 0.0
  %552 = vmatpush1.msra.mxu0 0.0
  %553 = vmatprep.subr.mxu0 0.0
  %554 = vmatpush1.msra.mxu0 0.0
  %555 = vmatprep.subr.mxu0 0.0
  %556 = vmatpush1.msra.mxu0 0.0
  %557 = vmatprep.subr.mxu0 0.0
  %558 = vmatpush1.msra.mxu0 0.0
  %559 = vmatprep.subr.mxu0 0.0
  %560 = vmatpush1.msra.mxu0 0.0
  %561 = vmatprep.subr.mxu0 0.0
  %562 = vmatpush1.msra.mxu0 0.0
  %563 = vmatprep.subr.mxu0 0.0
  %564 = vmatpush1.msra.mxu0 0.0
  %565 = vmatprep.subr.mxu0 0.0
  %566 = vmatpush1.msra.mxu0 0.0
  %567 = vmatprep.subr.mxu0 0.0
  %568 = vmatpush1.msra.mxu0 0.0
  %569 = vmatprep.subr.mxu0 0.0
  %570 = vmatpush1.msra.mxu0 0.0
  %571 = vmatprep.subr.mxu0 0.0
  %572 = vmatpush1.msra.mxu0 0.0
  %573 = vmatprep.subr.mxu0 0.0
  %574 = vmatpush1.msra.mxu0 0.0
  %575 = vmatprep.subr.mxu0 0.0
  %576 = vmatpush1.msra.mxu0 0.0
  %577 = vmatprep.subr.mxu0 0.0
  %578 = vmatpush1.msra.mxu0 0.0
  %579 = vmatprep.subr.mxu0 0.0
  %580 = vmatpush1.msra.mxu0 0.0
  %581 = vmatprep.subr.mxu0 0.0
  %582 = vmatpush1.msra.mxu0 0.0
  %583 = vmatprep.subr.mxu0 0.0
  %584 = vmatpush1.msra.mxu0 0.0
  %585 = vmatprep.subr.mxu0 0.0
  %586 = vmatpush1.msra.mxu0 0.0
  %587 = vmatprep.subr.mxu0 0.0
  %588 = vmatpush1.msra.mxu0 0.0
  %589 = vmatprep.subr.mxu0 0.0
  %590 = vmatpush1.msra.mxu0 0.0
  %591 = vmatprep.mubr.f32.mxu0 0.0
  %592 = vmatmul.mubr.f32.gmra.mrb[0].mxu0 %v50
  %v593 = vpop.f32.mrb[0].mxu0
  %v594 = vadd.f32 %v41, %v593
  %v595 = vpop.f32.mrb[0].mxu0
  %v596 = vadd.f32 %v41, %v595
  %597 = vmatprep.mubr.f32.mxu0 0.0
  %598 = vmatmul.mubr.f32.gmra.mrb[0].mxu0 %v53
  %v599 = vpop.f32.mrb[0].mxu0
  %v600 = vadd.f32 %v46, %v599
  %v601 = vpop.f32.mrb[0].mxu0
  %v602 = vadd.f32 %v46, %v601
  %603 = vdwg.mxu0
  %v604 = vmax.f32 %v409, %v517
  %v605 = vmax.f32 %v410, %v519
  %v606 = vmax.f32 %v411, %v594
  %v607 = vmax.f32 %v412, %v596
  %v608 = vmax.f32 %v413, %v523
  %v609 = vmax.f32 %v414, %v525
  %v610 = vmax.f32 %v415, %v600
  %v611 = vmax.f32 %v416, %v602
  %s612 = scalar_lea.vmem %s0, 480
  %v613 = vld [vmem:[%s612] sm:$0xff]
  %v614 = vld [vmem:[%s612 + $0x8] sm:$0xff]
  %v615 = vld [vmem:[%s612 + $0x10] sm:$0xff]
  %v616 = vld [vmem:[%s612 + $0x18] sm:$0xff]
  %v617 = vld [vmem:[%s612 + $0x20] sm:$0xff]
  %v618 = vld [vmem:[%s612 + $0x28] sm:$0xff]
  %v619 = vld [vmem:[%s612 + $0x30] sm:$0xff]
  %v620 = vld [vmem:[%s612 + $0x38] sm:$0xff]
  %v621 = vld [vmem:[%s612 + $0x40] sm:$0xff]
  %v622 = vld [vmem:[%s612 + $0x48] sm:$0xff]
  %v623 = vld [vmem:[%s612 + $0x50] sm:$0xff]
  %v624 = vld [vmem:[%s612 + $0x58] sm:$0xff]
  %v625 = vld [vmem:[%s612 + $0x60] sm:$0xff]
  %v626 = vld [vmem:[%s612 + $0x68] sm:$0xff]
  %v627 = vld [vmem:[%s612 + $0x70] sm:$0xff]
  %v628 = vld [vmem:[%s612 + $0x78] sm:$0xff]
  %v629 = vld [vmem:[%s612 + $0x80] sm:$0xf]
  %v630 = vld [vmem:[%s612 + $0x88] sm:$0xf]
  %v631 = vld [vmem:[%s612 + $0x90] sm:$0xf]
  %v632 = vld [vmem:[%s612 + $0x98] sm:$0xf]
  %v634 = vsel %vm55, %v629, 0
  %v637 = vsel %vm55, %v630, 0
  %v640 = vsel %vm55, %v631, 0
  %v643 = vsel %vm55, %v632, 0
  %645 = vmatprep.subr.mxu0 %v614
  %646 = vmatpush1.msra.mxu0 %v613
  %647 = vmatprep.subr.mxu0 %v618
  %648 = vmatpush1.msra.mxu0 %v617
  %649 = vmatprep.subr.mxu0 %v622
  %650 = vmatpush1.msra.mxu0 %v621
  %651 = vmatprep.subr.mxu0 %v626
  %652 = vmatpush1.msra.mxu0 %v625
  %653 = vmatprep.subr.mxu0 %v637
  %654 = vmatpush1.msra.mxu0 %v634
  %655 = vmatprep.subr.mxu0 0.0
  %656 = vmatpush1.msra.mxu0 0.0
  %657 = vmatprep.subr.mxu0 0.0
  %658 = vmatpush1.msra.mxu0 0.0
  %659 = vmatprep.subr.mxu0 0.0
  %660 = vmatpush1.msra.mxu0 0.0
  %661 = vmatprep.subr.mxu0 0.0
  %662 = vmatpush1.msra.mxu0 0.0
  %663 = vmatprep.subr.mxu0 0.0
  %664 = vmatpush1.msra.mxu0 0.0
  %665 = vmatprep.subr.mxu0 0.0
  %666 = vmatpush1.msra.mxu0 0.0
  %667 = vmatprep.subr.mxu0 0.0
  %668 = vmatpush1.msra.mxu0 0.0
  %669 = vmatprep.subr.mxu0 0.0
  %670 = vmatpush1.msra.mxu0 0.0
  %671 = vmatprep.subr.mxu0 0.0
  %672 = vmatpush1.msra.mxu0 0.0
  %673 = vmatprep.subr.mxu0 0.0
  %674 = vmatpush1.msra.mxu0 0.0
  %675 = vmatprep.subr.mxu0 0.0
  %676 = vmatpush1.msra.mxu0 0.0
  %677 = vmatprep.subr.mxu0 0.0
  %678 = vmatpush1.msra.mxu0 0.0
  %679 = vmatprep.subr.mxu0 0.0
  %680 = vmatpush1.msra.mxu0 0.0
  %681 = vmatprep.subr.mxu0 0.0
  %682 = vmatpush1.msra.mxu0 0.0
  %683 = vmatprep.subr.mxu0 0.0
  %684 = vmatpush1.msra.mxu0 0.0
  %685 = vmatprep.subr.mxu0 0.0
  %686 = vmatpush1.msra.mxu0 0.0
  %687 = vmatprep.subr.mxu0 0.0
  %688 = vmatpush1.msra.mxu0 0.0
  %689 = vmatprep.subr.mxu0 0.0
  %690 = vmatpush1.msra.mxu0 0.0
  %691 = vmatprep.subr.mxu0 0.0
  %692 = vmatpush1.msra.mxu0 0.0
  %693 = vmatprep.subr.mxu0 0.0
  %694 = vmatpush1.msra.mxu0 0.0
  %695 = vmatprep.subr.mxu0 0.0
  %696 = vmatpush1.msra.mxu0 0.0
  %697 = vmatprep.subr.mxu0 0.0
  %698 = vmatpush1.msra.mxu0 0.0
  %699 = vmatprep.subr.mxu0 0.0
  %700 = vmatpush1.msra.mxu0 0.0
  %701 = vmatprep.subr.mxu0 0.0
  %702 = vmatpush1.msra.mxu0 0.0
  %703 = vmatprep.subr.mxu0 0.0
  %704 = vmatpush1.msra.mxu0 0.0
  %705 = vmatprep.subr.mxu0 0.0
  %706 = vmatpush1.msra.mxu0 0.0
  %707 = vmatprep.subr.mxu0 0.0
  %708 = vmatpush1.msra.mxu0 0.0
  %709 = vmatprep.mubr.f32.mxu0 0.0
  %710 = vmatmul.mubr.f32.gmra.mrb[0].mxu0 %v50
  %v711 = vpop.f32.mrb[0].mxu0
  %v712 = vadd.f32 %v41, %v711
  %v713 = vpop.f32.mrb[0].mxu0
  %v714 = vadd.f32 %v41, %v713
  %715 = vmatprep.mubr.f32.mxu0 0.0
  %716 = vmatmul.mubr.f32.gmra.mrb[0].mxu0 %v53
  %v717 = vpop.f32.mrb[0].mxu0
  %v718 = vadd.f32 %v46, %v717
  %v719 = vpop.f32.mrb[0].mxu0
  %v720 = vadd.f32 %v46, %v719
  %721 = vdwg.mxu0
  %722 = vmatprep.subr.mxu0 %v616
  %723 = vmatpush1.msra.mxu0 %v615
  %724 = vmatprep.subr.mxu0 %v620
  %725 = vmatpush1.msra.mxu0 %v619
  %726 = vmatprep.subr.mxu0 %v624
  %727 = vmatpush1.msra.mxu0 %v623
  %728 = vmatprep.subr.mxu0 %v628
  %729 = vmatpush1.msra.mxu0 %v627
  %730 = vmatprep.subr.mxu0 %v643
  %731 = vmatpush1.msra.mxu0 %v640
  %732 = vmatprep.subr.mxu0 0.0
  %733 = vmatpush1.msra.mxu0 0.0
  %734 = vmatprep.subr.mxu0 0.0
  %735 = vmatpush1.msra.mxu0 0.0
  %736 = vmatprep.subr.mxu0 0.0
  %737 = vmatpush1.msra.mxu0 0.0
  %738 = vmatprep.subr.mxu0 0.0
  %739 = vmatpush1.msra.mxu0 0.0
  %740 = vmatprep.subr.mxu0 0.0
  %741 = vmatpush1.msra.mxu0 0.0
  %742 = vmatprep.subr.mxu0 0.0
  %743 = vmatpush1.msra.mxu0 0.0
  %744 = vmatprep.subr.mxu0 0.0
  %745 = vmatpush1.msra.mxu0 0.0
  %746 = vmatprep.subr.mxu0 0.0
  %747 = vmatpush1.msra.mxu0 0.0
  %748 = vmatprep.subr.mxu0 0.0
  %749 = vmatpush1.msra.mxu0 0.0
  %750 = vmatprep.subr.mxu0 0.0
  %751 = vmatpush1.msra.mxu0 0.0
  %752 = vmatprep.subr.mxu0 0.0
  %753 = vmatpush1.msra.mxu0 0.0
  %754 = vmatprep.subr.mxu0 0.0
  %755 = vmatpush1.msra.mxu0 0.0
  %756 = vmatprep.subr.mxu0 0.0
  %757 = vmatpush1.msra.mxu0 0.0
  %758 = vmatprep.subr.mxu0 0.0
  %759 = vmatpush1.msra.mxu0 0.0
  %760 = vmatprep.subr.mxu0 0.0
  %761 = vmatpush1.msra.mxu0 0.0
  %762 = vmatprep.subr.mxu0 0.0
  %763 = vmatpush1.msra.mxu0 0.0
  %764 = vmatprep.subr.mxu0 0.0
  %765 = vmatpush1.msra.mxu0 0.0
  %766 = vmatprep.subr.mxu0 0.0
  %767 = vmatpush1.msra.mxu0 0.0
  %768 = vmatprep.subr.mxu0 0.0
  %769 = vmatpush1.msra.mxu0 0.0
  %770 = vmatprep.subr.mxu0 0.0
  %771 = vmatpush1.msra.mxu0 0.0
  %772 = vmatprep.subr.mxu0 0.0
  %773 = vmatpush1.msra.mxu0 0.0
  %774 = vmatprep.subr.mxu0 0.0
  %775 = vmatpush1.msra.mxu0 0.0
  %776 = vmatprep.subr.mxu0 0.0
  %777 = vmatpush1.msra.mxu0 0.0
  %778 = vmatprep.subr.mxu0 0.0
  %779 = vmatpush1.msra.mxu0 0.0
  %780 = vmatprep.subr.mxu0 0.0
  %781 = vmatpush1.msra.mxu0 0.0
  %782 = vmatprep.subr.mxu0 0.0
  %783 = vmatpush1.msra.mxu0 0.0
  %784 = vmatprep.subr.mxu0 0.0
  %785 = vmatpush1.msra.mxu0 0.0
  %786 = vmatprep.mubr.f32.mxu0 0.0
  %787 = vmatmul.mubr.f32.gmra.mrb[0].mxu0 %v50
  %v788 = vpop.f32.mrb[0].mxu0
  %v789 = vadd.f32 %v41, %v788
  %v790 = vpop.f32.mrb[0].mxu0
  %v791 = vadd.f32 %v41, %v790
  %792 = vmatprep.mubr.f32.mxu0 0.0
  %793 = vmatmul.mubr.f32.gmra.mrb[0].mxu0 %v53
  %v794 = vpop.f32.mrb[0].mxu0
  %v795 = vadd.f32 %v46, %v794
  %v796 = vpop.f32.mrb[0].mxu0
  %v797 = vadd.f32 %v46, %v796
  %798 = vdwg.mxu0
  %v799 = vmax.f32 %v604, %v712
  %v800 = vmax.f32 %v605, %v714
  %v801 = vmax.f32 %v606, %v789
  %v802 = vmax.f32 %v607, %v791
  %v803 = vmax.f32 %v608, %v718
  %v804 = vmax.f32 %v609, %v720
  %v805 = vmax.f32 %v610, %v795
  %v806 = vmax.f32 %v611, %v797
  %v807 = vmax.f32 %v799, 0.0
  %v808 = vmax.f32 %v800, 0.0
  %v809 = vmax.f32 %v801, 0.0
  %v810 = vmax.f32 %v802, 0.0
  %v811 = vmax.f32 %v803, 0.0
  %v812 = vmax.f32 %v804, 0.0
  %v813 = vmax.f32 %v805, 0.0
  %v814 = vmax.f32 %v806, 0.0
  %815 = vst [vmem:[%s3] sm:$0xff] %v807
  %816 = vst [vmem:[%s3 + $0x8] sm:$0xff] %v808
  %817 = vst [vmem:[%s3 + $0x10] sm:$0xff] %v809
  %vm818 = vcmask 539648
  %819 = vst.msk [vmem:[%s3 + $0x18] sm:$0xff] %vm818, %v810
  %820 = vst [vmem:[%s3 + $0x20] sm:$0xff] %v811
  %821 = vst [vmem:[%s3 + $0x28] sm:$0xff] %v812
  %822 = vst [vmem:[%s3 + $0x30] sm:$0xff] %v813
  %823 = vst.msk [vmem:[%s3 + $0x38] sm:$0xff] %vm818, %v814
  // Predicated region
  $region14: #{basic_cnn_forward.3} parent=0 // pred_check
    _
  $region15: #{basic_cnn_forward.3} parent=0 // pred_check_branch
    %825 = sbr.rel (0) target = $region17
  $region16: #{basic_cnn_forward.3} parent=0 // pred_region
    _
  $region17: #{basic_cnn_forward.3} parent=0 // pred_fallthru
    _
  // Predicated region
  $region18: #{basic_cnn_forward.3} parent=0 // pred_check
    _
  $region19: #{basic_cnn_forward.3} parent=0 // pred_check_branch
    %827 = sbr.rel (0) target = $region21
  $region20: #{basic_cnn_forward.3} parent=0 // pred_region
    _
  $region21: #{basic_cnn_forward.3} parent=0 // pred_fallthru
    _

// kernel: basic_cnn_forward.4
$region0: #{basic_cnn_forward.4}
  #allocation0 [shape = 'u32[]', space=smem, size = 0x4, offset = 0x4, fixed_abs, tag = 'smem constant byte address 0x4 - core index']
  #allocation1 [shape = 'u32[144,128]{1,0:T(1,128)}', space=vmem, size = 0x12000, scoped, tag = 'internal scratch']
  %s0 = inlined_call_operand.vmem [shape: f32[4,144,72], index: 0, kind: input, shape index: {}]
  %s1 = inlined_call_operand.vmem [shape: f32[32,144], index: 1, kind: input, shape index: {}]
  %s2 = inlined_call_operand.vmem [shape: f32[32,1], index: 2, kind: input, shape index: {}]
  %s3 = inlined_call_operand.vmem [shape: f32[32,72], index: 3, kind: output, shape index: {}]
  %s4 = sld [smem:[#allocation0]]
  $region22: #{basic_cnn_forward.4} parent=0
    _
  %s6 = ssub.s32 1, %s4
  %s7 = scalar_select 0, %s6, %s4
  // Predicated region
  $region2: #{basic_cnn_forward.4} parent=0 // pred_check
    _
  $region3: #{basic_cnn_forward.4} parent=0 // pred_check_branch
    %9 = sbr.rel (0) target = $region5
  $region4: #{basic_cnn_forward.4} parent=0 // pred_region
    _
  $region5: #{basic_cnn_forward.4} parent=0 // pred_fallthru
    _
  // Predicated region
  $region6: #{basic_cnn_forward.4} parent=0 // pred_check
    _
  $region7: #{basic_cnn_forward.4} parent=0 // pred_check_branch
    %11 = sbr.rel (0) target = $region9
  $region8: #{basic_cnn_forward.4} parent=0 // pred_region
    _
  $region9: #{basic_cnn_forward.4} parent=0 // pred_fallthru
    _
  // Predicated region
  $region10: #{basic_cnn_forward.4} parent=0 // pred_check
    _
  $region11: #{basic_cnn_forward.4} parent=0 // pred_check_branch
    %13 = sbr.rel (0) target = $region13
  $region12: #{basic_cnn_forward.4} parent=0 // pred_region
    _
  $region13: #{basic_cnn_forward.4} parent=0 // pred_fallthru
    _
  %v14 = vld [vmem:[%s1] sm:$0xff]
  %v15 = vld [vmem:[%s1 + $0x8] sm:$0xff]
  %v16 = vld [vmem:[%s1 + $0x10] sm:$0xff]
  %v17 = vld [vmem:[%s1 + $0x18] sm:$0xff]
  %v18 = vld [vmem:[%s1 + $0x20] sm:$0xff]
  %v19 = vld [vmem:[%s1 + $0x28] sm:$0xff]
  %v20 = vld [vmem:[%s1 + $0x30] sm:$0xff]
  %v21 = vld [vmem:[%s1 + $0x38] sm:$0xff]
  %v22 = vld [vmem:[%s2] sm:$0xff]
  %v23 = vld [vmem:[%s2 + $0x8] sm:$0xff]
  %v24 = vld [vmem:[%s2 + $0x10] sm:$0xff]
  %v25 = vld [vmem:[%s2 + $0x18] sm:$0xff]
  %v26 = vld [vmem:[%s0] sm:$0xff]
  %v27 = vld [vmem:[%s0 + $0x8] sm:$0xff]
  %v28 = vld [vmem:[%s0 + $0x10] sm:$0xff]
  %v29 = vld [vmem:[%s0 + $0x18] sm:$0xff]
  %v30 = vld [vmem:[%s0 + $0x20] sm:$0xff]
  %v31 = vld [vmem:[%s0 + $0x28] sm:$0xff]
  %v32 = vld [vmem:[%s0 + $0x30] sm:$0xff]
  %v33 = vld [vmem:[%s0 + $0x38] sm:$0xff]
  %v34 = vld [vmem:[%s0 + $0x40] sm:$0xff]
  %v35 = vld [vmem:[%s0 + $0x48] sm:$0xff]
  %v36 = vld [vmem:[%s0 + $0x50] sm:$0xff]
  %v37 = vld [vmem:[%s0 + $0x58] sm:$0xff]
  %v38 = vld [vmem:[%s0 + $0x60] sm:$0xff]
  %v39 = vld [vmem:[%s0 + $0x68] sm:$0xff]
  %v40 = vld [vmem:[%s0 + $0x70] sm:$0xff]
  %v41 = vld [vmem:[%s0 + $0x78] sm:$0xff]
  %v42 = vld [vmem:[%s0 + $0x80] sm:$0xff]
  %v43 = vld [vmem:[%s0 + $0x88] sm:$0xff]
  %45 = vset.pattern.permute.xlu0 0
  %46 = vperm.xlu0 %45, %v22
  %v47 = vpop.permute.xlu0 %46
  %50 = vset.pattern.permute.xlu0 0
  %51 = vperm.xlu0 %50, %v23
  %v52 = vpop.permute.xlu0 %51
  %55 = vset.pattern.permute.xlu0 0
  %56 = vperm.xlu0 %55, %v24
  %v57 = vpop.permute.xlu0 %56
  %60 = vset.pattern.permute.xlu0 0
  %61 = vperm.xlu0 %60, %v25
  %v62 = vpop.permute.xlu0 %61
  %vm64 = vcmask 130048
  %v66 = vsel %vm64, %v15, 0
  %v69 = vsel %vm64, %v17, 0
  %v72 = vsel %vm64, %v19, 0
  %v75 = vsel %vm64, %v21, 0
  %77 = vmatprep.subr.mxu0 0.0
  %78 = vmatpush1.msra.mxu0 %v26
  %79 = vmatprep.subr.mxu0 0.0
  %80 = vmatpush1.msra.mxu0 %v27
  %81 = vmatprep.subr.mxu0 0.0
  %82 = vmatpush1.msra.mxu0 %v28
  %83 = vmatprep.subr.mxu0 0.0
  %84 = vmatpush1.msra.mxu0 %v29
  %85 = vmatprep.subr.mxu0 0.0
  %86 = vmatpush1.msra.mxu0 %v30
  %87 = vmatprep.subr.mxu0 0.0
  %88 = vmatpush1.msra.mxu0 %v31
  %89 = vmatprep.subr.mxu0 0.0
  %90 = vmatpush1.msra.mxu0 %v32
  %91 = vmatprep.subr.mxu0 0.0
  %92 = vmatpush1.msra.mxu0 %v33
  %93 = vmatprep.subr.mxu0 0.0
  %94 = vmatpush1.msra.mxu0 %v34
  %95 = vmatprep.subr.mxu0 0.0
  %96 = vmatpush1.msra.mxu0 %v35
  %97 = vmatprep.subr.mxu0 0.0
  %98 = vmatpush1.msra.mxu0 %v36
  %99 = vmatprep.subr.mxu0 0.0
  %100 = vmatpush1.msra.mxu0 %v37
  %101 = vmatprep.subr.mxu0 0.0
  %102 = vmatpush1.msra.mxu0 %v38
  %103 = vmatprep.subr.mxu0 0.0
  %104 = vmatpush1.msra.mxu0 %v39
  %105 = vmatprep.subr.mxu0 0.0
  %106 = vmatpush1.msra.mxu0 %v40
  %107 = vmatprep.subr.mxu0 0.0
  %108 = vmatpush1.msra.mxu0 %v41
  %109 = vmatprep.subr.mxu0 0.0
  %110 = vmatpush1.msra.mxu0 %v42
  %111 = vmatprep.subr.mxu0 0.0
  %112 = vmatpush1.msra.mxu0 %v43
  %113 = vmatprep.subr.mxu0 0.0
  %114 = vmatpush1.msra.mxu0 0.0
  %115 = vmatprep.subr.mxu0 0.0
  %116 = vmatpush1.msra.mxu0 0.0
  %117 = vmatprep.subr.mxu0 0.0
  %118 = vmatpush1.msra.mxu0 0.0
  %119 = vmatprep.subr.mxu0 0.0
  %120 = vmatpush1.msra.mxu0 0.0
  %121 = vmatprep.subr.mxu0 0.0
  %122 = vmatpush1.msra.mxu0 0.0
  %123 = vmatprep.subr.mxu0 0.0
  %124 = vmatpush1.msra.mxu0 0.0
  %125 = vmatprep.subr.mxu0 0.0
  %126 = vmatpush1.msra.mxu0 0.0
  %127 = vmatprep.subr.mxu0 0.0
  %128 = vmatpush1.msra.mxu0 0.0
  %129 = vmatprep.subr.mxu0 0.0
  %130 = vmatpush1.msra.mxu0 0.0
  %131 = vmatprep.subr.mxu0 0.0
  %132 = vmatpush1.msra.mxu0 0.0
  %133 = vmatprep.subr.mxu0 0.0
  %134 = vmatpush1.msra.mxu0 0.0
  %135 = vmatprep.subr.mxu0 0.0
  %136 = vmatpush1.msra.mxu0 0.0
  %137 = vmatprep.subr.mxu0 0.0
  %138 = vmatpush1.msra.mxu0 0.0
  %139 = vmatprep.subr.mxu0 0.0
  %140 = vmatpush1.msra.mxu0 0.0
  %141 = vmatprep.mubr.f32.mxu0 %v66
  %142 = vmatmul.mubr.f32.gmra.mrb[0].mxu0 %v14
  %v143 = vpop.f32.mrb[0].mxu0
  %v144 = vadd.f32 %v47, %v143
  %v145 = vpop.f32.mrb[0].mxu0
  %146 = vmatprep.mubr.f32.mxu0 %v69
  %147 = vmatmul.mubr.f32.gmra.mrb[0].mxu0 %v16
  %v148 = vpop.f32.mrb[0].mxu0
  %v149 = vadd.f32 %v52, %v148
  %v150 = vpop.f32.mrb[0].mxu0
  %151 = vmatprep.mubr.f32.mxu0 %v72
  %152 = vmatmul.mubr.f32.gmra.mrb[0].mxu0 %v18
  %v153 = vpop.f32.mrb[0].mxu0
  %v154 = vadd.f32 %v57, %v153
  %v155 = vpop.f32.mrb[0].mxu0
  %156 = vmatprep.mubr.f32.mxu0 %v75
  %157 = vmatmul.mubr.f32.gmra.mrb[0].mxu0 %v20
  %v158 = vpop.f32.mrb[0].mxu0
  %v159 = vadd.f32 %v62, %v158
  %v160 = vpop.f32.mrb[0].mxu0
  %161 = vdwg.mxu0
  %s162 = scalar_lea.vmem %s0, 144
  %v163 = vld [vmem:[%s162] sm:$0xff]
  %v164 = vld [vmem:[%s162 + $0x8] sm:$0xff]
  %v165 = vld [vmem:[%s162 + $0x10] sm:$0xff]
  %v166 = vld [vmem:[%s162 + $0x18] sm:$0xff]
  %v167 = vld [vmem:[%s162 + $0x20] sm:$0xff]
  %v168 = vld [vmem:[%s162 + $0x28] sm:$0xff]
  %v169 = vld [vmem:[%s162 + $0x30] sm:$0xff]
  %v170 = vld [vmem:[%s162 + $0x38] sm:$0xff]
  %v171 = vld [vmem:[%s162 + $0x40] sm:$0xff]
  %v172 = vld [vmem:[%s162 + $0x48] sm:$0xff]
  %v173 = vld [vmem:[%s162 + $0x50] sm:$0xff]
  %v174 = vld [vmem:[%s162 + $0x58] sm:$0xff]
  %v175 = vld [vmem:[%s162 + $0x60] sm:$0xff]
  %v176 = vld [vmem:[%s162 + $0x68] sm:$0xff]
  %v177 = vld [vmem:[%s162 + $0x70] sm:$0xff]
  %v178 = vld [vmem:[%s162 + $0x78] sm:$0xff]
  %v179 = vld [vmem:[%s162 + $0x80] sm:$0xff]
  %v180 = vld [vmem:[%s162 + $0x88] sm:$0xff]
  %181 = vmatprep.subr.mxu0 0.0
  %182 = vmatpush1.msra.mxu0 %v163
  %183 = vmatprep.subr.mxu0 0.0
  %184 = vmatpush1.msra.mxu0 %v164
  %185 = vmatprep.subr.mxu0 0.0
  %186 = vmatpush1.msra.mxu0 %v165
  %187 = vmatprep.subr.mxu0 0.0
  %188 = vmatpush1.msra.mxu0 %v166
  %189 = vmatprep.subr.mxu0 0.0
  %190 = vmatpush1.msra.mxu0 %v167
  %191 = vmatprep.subr.mxu0 0.0
  %192 = vmatpush1.msra.mxu0 %v168
  %193 = vmatprep.subr.mxu0 0.0
  %194 = vmatpush1.msra.mxu0 %v169
  %195 = vmatprep.subr.mxu0 0.0
  %196 = vmatpush1.msra.mxu0 %v170
  %197 = vmatprep.subr.mxu0 0.0
  %198 = vmatpush1.msra.mxu0 %v171
  %199 = vmatprep.subr.mxu0 0.0
  %200 = vmatpush1.msra.mxu0 %v172
  %201 = vmatprep.subr.mxu0 0.0
  %202 = vmatpush1.msra.mxu0 %v173
  %203 = vmatprep.subr.mxu0 0.0
  %204 = vmatpush1.msra.mxu0 %v174
  %205 = vmatprep.subr.mxu0 0.0
  %206 = vmatpush1.msra.mxu0 %v175
  %207 = vmatprep.subr.mxu0 0.0
  %208 = vmatpush1.msra.mxu0 %v176
  %209 = vmatprep.subr.mxu0 0.0
  %210 = vmatpush1.msra.mxu0 %v177
  %211 = vmatprep.subr.mxu0 0.0
  %212 = vmatpush1.msra.mxu0 %v178
  %213 = vmatprep.subr.mxu0 0.0
  %214 = vmatpush1.msra.mxu0 %v179
  %215 = vmatprep.subr.mxu0 0.0
  %216 = vmatpush1.msra.mxu0 %v180
  %217 = vmatprep.subr.mxu0 0.0
  %218 = vmatpush1.msra.mxu0 0.0
  %219 = vmatprep.subr.mxu0 0.0
  %220 = vmatpush1.msra.mxu0 0.0
  %221 = vmatprep.subr.mxu0 0.0
  %222 = vmatpush1.msra.mxu0 0.0
  %223 = vmatprep.subr.mxu0 0.0
  %224 = vmatpush1.msra.mxu0 0.0
  %225 = vmatprep.subr.mxu0 0.0
  %226 = vmatpush1.msra.mxu0 0.0
  %227 = vmatprep.subr.mxu0 0.0
  %228 = vmatpush1.msra.mxu0 0.0
  %229 = vmatprep.subr.mxu0 0.0
  %230 = vmatpush1.msra.mxu0 0.0
  %231 = vmatprep.subr.mxu0 0.0
  %232 = vmatpush1.msra.mxu0 0.0
  %233 = vmatprep.subr.mxu0 0.0
  %234 = vmatpush1.msra.mxu0 0.0
  %235 = vmatprep.subr.mxu0 0.0
  %236 = vmatpush1.msra.mxu0 0.0
  %237 = vmatprep.subr.mxu0 0.0
  %238 = vmatpush1.msra.mxu0 0.0
  %239 = vmatprep.subr.mxu0 0.0
  %240 = vmatpush1.msra.mxu0 0.0
  %241 = vmatprep.subr.mxu0 0.0
  %242 = vmatpush1.msra.mxu0 0.0
  %243 = vmatprep.subr.mxu0 0.0
  %244 = vmatpush1.msra.mxu0 0.0
  %245 = vmatprep.mubr.f32.mxu0 %v66
  %246 = vmatmul.mubr.f32.gmra.mrb[0].mxu0 %v14
  %v247 = vpop.f32.mrb[0].mxu0
  %v248 = vadd.f32 %v47, %v247
  %v249 = vpop.f32.mrb[0].mxu0
  %250 = vmatprep.mubr.f32.mxu0 %v69
  %251 = vmatmul.mubr.f32.gmra.mrb[0].mxu0 %v16
  %v252 = vpop.f32.mrb[0].mxu0
  %v253 = vadd.f32 %v52, %v252
  %v254 = vpop.f32.mrb[0].mxu0
  %255 = vmatprep.mubr.f32.mxu0 %v72
  %256 = vmatmul.mubr.f32.gmra.mrb[0].mxu0 %v18
  %v257 = vpop.f32.mrb[0].mxu0
  %v258 = vadd.f32 %v57, %v257
  %v259 = vpop.f32.mrb[0].mxu0
  %260 = vmatprep.mubr.f32.mxu0 %v75
  %261 = vmatmul.mubr.f32.gmra.mrb[0].mxu0 %v20
  %v262 = vpop.f32.mrb[0].mxu0
  %v263 = vadd.f32 %v62, %v262
  %v264 = vpop.f32.mrb[0].mxu0
  %265 = vdwg.mxu0
  %v266 = vmax.f32 %v144, %v248
  %v267 = vmax.f32 %v149, %v253
  %v268 = vmax.f32 %v154, %v258
  %v269 = vmax.f32 %v159, %v263
  %s270 = scalar_lea.vmem %s0, 288
  %v271 = vld [vmem:[%s270] sm:$0xff]
  %v272 = vld [vmem:[%s270 + $0x8] sm:$0xff]
  %v273 = vld [vmem:[%s270 + $0x10] sm:$0xff]
  %v274 = vld [vmem:[%s270 + $0x18] sm:$0xff]
  %v275 = vld [vmem:[%s270 + $0x20] sm:$0xff]
  %v276 = vld [vmem:[%s270 + $0x28] sm:$0xff]
  %v277 = vld [vmem:[%s270 + $0x30] sm:$0xff]
  %v278 = vld [vmem:[%s270 + $0x38] sm:$0xff]
  %v279 = vld [vmem:[%s270 + $0x40] sm:$0xff]
  %v280 = vld [vmem:[%s270 + $0x48] sm:$0xff]
  %v281 = vld [vmem:[%s270 + $0x50] sm:$0xff]
  %v282 = vld [vmem:[%s270 + $0x58] sm:$0xff]
  %v283 = vld [vmem:[%s270 + $0x60] sm:$0xff]
  %v284 = vld [vmem:[%s270 + $0x68] sm:$0xff]
  %v285 = vld [vmem:[%s270 + $0x70] sm:$0xff]
  %v286 = vld [vmem:[%s270 + $0x78] sm:$0xff]
  %v287 = vld [vmem:[%s270 + $0x80] sm:$0xff]
  %v288 = vld [vmem:[%s270 + $0x88] sm:$0xff]
  %289 = vmatprep.subr.mxu0 0.0
  %290 = vmatpush1.msra.mxu0 %v271
  %291 = vmatprep.subr.mxu0 0.0
  %292 = vmatpush1.msra.mxu0 %v272
  %293 = vmatprep.subr.mxu0 0.0
  %294 = vmatpush1.msra.mxu0 %v273
  %295 = vmatprep.subr.mxu0 0.0
  %296 = vmatpush1.msra.mxu0 %v274
  %297 = vmatprep.subr.mxu0 0.0
  %298 = vmatpush1.msra.mxu0 %v275
  %299 = vmatprep.subr.mxu0 0.0
  %300 = vmatpush1.msra.mxu0 %v276
  %301 = vmatprep.subr.mxu0 0.0
  %302 = vmatpush1.msra.mxu0 %v277
  %303 = vmatprep.subr.mxu0 0.0
  %304 = vmatpush1.msra.mxu0 %v278
  %305 = vmatprep.subr.mxu0 0.0
  %306 = vmatpush1.msra.mxu0 %v279
  %307 = vmatprep.subr.mxu0 0.0
  %308 = vmatpush1.msra.mxu0 %v280
  %309 = vmatprep.subr.mxu0 0.0
  %310 = vmatpush1.msra.mxu0 %v281
  %311 = vmatprep.subr.mxu0 0.0
  %312 = vmatpush1.msra.mxu0 %v282
  %313 = vmatprep.subr.mxu0 0.0
  %314 = vmatpush1.msra.mxu0 %v283
  %315 = vmatprep.subr.mxu0 0.0
  %316 = vmatpush1.msra.mxu0 %v284
  %317 = vmatprep.subr.mxu0 0.0
  %318 = vmatpush1.msra.mxu0 %v285
  %319 = vmatprep.subr.mxu0 0.0
  %320 = vmatpush1.msra.mxu0 %v286
  %321 = vmatprep.subr.mxu0 0.0
  %322 = vmatpush1.msra.mxu0 %v287
  %323 = vmatprep.subr.mxu0 0.0
  %324 = vmatpush1.msra.mxu0 %v288
  %325 = vmatprep.subr.mxu0 0.0
  %326 = vmatpush1.msra.mxu0 0.0
  %327 = vmatprep.subr.mxu0 0.0
  %328 = vmatpush1.msra.mxu0 0.0
  %329 = vmatprep.subr.mxu0 0.0
  %330 = vmatpush1.msra.mxu0 0.0
  %331 = vmatprep.subr.mxu0 0.0
  %332 = vmatpush1.msra.mxu0 0.0
  %333 = vmatprep.subr.mxu0 0.0
  %334 = vmatpush1.msra.mxu0 0.0
  %335 = vmatprep.subr.mxu0 0.0
  %336 = vmatpush1.msra.mxu0 0.0
  %337 = vmatprep.subr.mxu0 0.0
  %338 = vmatpush1.msra.mxu0 0.0
  %339 = vmatprep.subr.mxu0 0.0
  %340 = vmatpush1.msra.mxu0 0.0
  %341 = vmatprep.subr.mxu0 0.0
  %342 = vmatpush1.msra.mxu0 0.0
  %343 = vmatprep.subr.mxu0 0.0
  %344 = vmatpush1.msra.mxu0 0.0
  %345 = vmatprep.subr.mxu0 0.0
  %346 = vmatpush1.msra.mxu0 0.0
  %347 = vmatprep.subr.mxu0 0.0
  %348 = vmatpush1.msra.mxu0 0.0
  %349 = vmatprep.subr.mxu0 0.0
  %350 = vmatpush1.msra.mxu0 0.0
  %351 = vmatprep.subr.mxu0 0.0
  %352 = vmatpush1.msra.mxu0 0.0
  %353 = vmatprep.mubr.f32.mxu0 %v66
  %354 = vmatmul.mubr.f32.gmra.mrb[0].mxu0 %v14
  %v355 = vpop.f32.mrb[0].mxu0
  %v356 = vadd.f32 %v47, %v355
  %v357 = vpop.f32.mrb[0].mxu0
  %358 = vmatprep.mubr.f32.mxu0 %v69
  %359 = vmatmul.mubr.f32.gmra.mrb[0].mxu0 %v16
  %v360 = vpop.f32.mrb[0].mxu0
  %v361 = vadd.f32 %v52, %v360
  %v362 = vpop.f32.mrb[0].mxu0
  %363 = vmatprep.mubr.f32.mxu0 %v72
  %364 = vmatmul.mubr.f32.gmra.mrb[0].mxu0 %v18
  %v365 = vpop.f32.mrb[0].mxu0
  %v366 = vadd.f32 %v57, %v365
  %v367 = vpop.f32.mrb[0].mxu0
  %368 = vmatprep.mubr.f32.mxu0 %v75
  %369 = vmatmul.mubr.f32.gmra.mrb[0].mxu0 %v20
  %v370 = vpop.f32.mrb[0].mxu0
  %v371 = vadd.f32 %v62, %v370
  %v372 = vpop.f32.mrb[0].mxu0
  %373 = vdwg.mxu0
  %v374 = vmax.f32 %v266, %v356
  %v375 = vmax.f32 %v267, %v361
  %v376 = vmax.f32 %v268, %v366
  %v377 = vmax.f32 %v269, %v371
  %s378 = scalar_lea.vmem %s0, 432
  %v379 = vld [vmem:[%s378] sm:$0xff]
  %v380 = vld [vmem:[%s378 + $0x8] sm:$0xff]
  %v381 = vld [vmem:[%s378 + $0x10] sm:$0xff]
  %v382 = vld [vmem:[%s378 + $0x18] sm:$0xff]
  %v383 = vld [vmem:[%s378 + $0x20] sm:$0xff]
  %v384 = vld [vmem:[%s378 + $0x28] sm:$0xff]
  %v385 = vld [vmem:[%s378 + $0x30] sm:$0xff]
  %v386 = vld [vmem:[%s378 + $0x38] sm:$0xff]
  %v387 = vld [vmem:[%s378 + $0x40] sm:$0xff]
  %v388 = vld [vmem:[%s378 + $0x48] sm:$0xff]
  %v389 = vld [vmem:[%s378 + $0x50] sm:$0xff]
  %v390 = vld [vmem:[%s378 + $0x58] sm:$0xff]
  %v391 = vld [vmem:[%s378 + $0x60] sm:$0xff]
  %v392 = vld [vmem:[%s378 + $0x68] sm:$0xff]
  %v393 = vld [vmem:[%s378 + $0x70] sm:$0xff]
  %v394 = vld [vmem:[%s378 + $0x78] sm:$0xff]
  %v395 = vld [vmem:[%s378 + $0x80] sm:$0xff]
  %v396 = vld [vmem:[%s378 + $0x88] sm:$0xff]
  %397 = vmatprep.subr.mxu0 0.0
  %398 = vmatpush1.msra.mxu0 %v379
  %399 = vmatprep.subr.mxu0 0.0
  %400 = vmatpush1.msra.mxu0 %v380
  %401 = vmatprep.subr.mxu0 0.0
  %402 = vmatpush1.msra.mxu0 %v381
  %403 = vmatprep.subr.mxu0 0.0
  %404 = vmatpush1.msra.mxu0 %v382
  %405 = vmatprep.subr.mxu0 0.0
  %406 = vmatpush1.msra.mxu0 %v383
  %407 = vmatprep.subr.mxu0 0.0
  %408 = vmatpush1.msra.mxu0 %v384
  %409 = vmatprep.subr.mxu0 0.0
  %410 = vmatpush1.msra.mxu0 %v385
  %411 = vmatprep.subr.mxu0 0.0
  %412 = vmatpush1.msra.mxu0 %v386
  %413 = vmatprep.subr.mxu0 0.0
  %414 = vmatpush1.msra.mxu0 %v387
  %415 = vmatprep.subr.mxu0 0.0
  %416 = vmatpush1.msra.mxu0 %v388
  %417 = vmatprep.subr.mxu0 0.0
  %418 = vmatpush1.msra.mxu0 %v389
  %419 = vmatprep.subr.mxu0 0.0
  %420 = vmatpush1.msra.mxu0 %v390
  %421 = vmatprep.subr.mxu0 0.0
  %422 = vmatpush1.msra.mxu0 %v391
  %423 = vmatprep.subr.mxu0 0.0
  %424 = vmatpush1.msra.mxu0 %v392
  %425 = vmatprep.subr.mxu0 0.0
  %426 = vmatpush1.msra.mxu0 %v393
  %427 = vmatprep.subr.mxu0 0.0
  %428 = vmatpush1.msra.mxu0 %v394
  %429 = vmatprep.subr.mxu0 0.0
  %430 = vmatpush1.msra.mxu0 %v395
  %431 = vmatprep.subr.mxu0 0.0
  %432 = vmatpush1.msra.mxu0 %v396
  %433 = vmatprep.subr.mxu0 0.0
  %434 = vmatpush1.msra.mxu0 0.0
  %435 = vmatprep.subr.mxu0 0.0
  %436 = vmatpush1.msra.mxu0 0.0
  %437 = vmatprep.subr.mxu0 0.0
  %438 = vmatpush1.msra.mxu0 0.0
  %439 = vmatprep.subr.mxu0 0.0
  %440 = vmatpush1.msra.mxu0 0.0
  %441 = vmatprep.subr.mxu0 0.0
  %442 = vmatpush1.msra.mxu0 0.0
  %443 = vmatprep.subr.mxu0 0.0
  %444 = vmatpush1.msra.mxu0 0.0
  %445 = vmatprep.subr.mxu0 0.0
  %446 = vmatpush1.msra.mxu0 0.0
  %447 = vmatprep.subr.mxu0 0.0
  %448 = vmatpush1.msra.mxu0 0.0
  %449 = vmatprep.subr.mxu0 0.0
  %450 = vmatpush1.msra.mxu0 0.0
  %451 = vmatprep.subr.mxu0 0.0
  %452 = vmatpush1.msra.mxu0 0.0
  %453 = vmatprep.subr.mxu0 0.0
  %454 = vmatpush1.msra.mxu0 0.0
  %455 = vmatprep.subr.mxu0 0.0
  %456 = vmatpush1.msra.mxu0 0.0
  %457 = vmatprep.subr.mxu0 0.0
  %458 = vmatpush1.msra.mxu0 0.0
  %459 = vmatprep.subr.mxu0 0.0
  %460 = vmatpush1.msra.mxu0 0.0
  %461 = vmatprep.mubr.f32.mxu0 %v66
  %462 = vmatmul.mubr.f32.gmra.mrb[0].mxu0 %v14
  %v463 = vpop.f32.mrb[0].mxu0
  %v464 = vadd.f32 %v47, %v463
  %v465 = vpop.f32.mrb[0].mxu0
  %466 = vmatprep.mubr.f32.mxu0 %v69
  %467 = vmatmul.mubr.f32.gmra.mrb[0].mxu0 %v16
  %v468 = vpop.f32.mrb[0].mxu0
  %v469 = vadd.f32 %v52, %v468
  %v470 = vpop.f32.mrb[0].mxu0
  %471 = vmatprep.mubr.f32.mxu0 %v72
  %472 = vmatmul.mubr.f32.gmra.mrb[0].mxu0 %v18
  %v473 = vpop.f32.mrb[0].mxu0
  %v474 = vadd.f32 %v57, %v473
  %v475 = vpop.f32.mrb[0].mxu0
  %476 = vmatprep.mubr.f32.mxu0 %v75
  %477 = vmatmul.mubr.f32.gmra.mrb[0].mxu0 %v20
  %v478 = vpop.f32.mrb[0].mxu0
  %v479 = vadd.f32 %v62, %v478
  %v480 = vpop.f32.mrb[0].mxu0
  %481 = vdwg.mxu0
  %v482 = vmax.f32 %v374, %v464
  %v483 = vmax.f32 %v375, %v469
  %v484 = vmax.f32 %v376, %v474
  %v485 = vmax.f32 %v377, %v479
  %v486 = vmax.f32 %v482, 0.0
  %v487 = vmax.f32 %v483, 0.0
  %v488 = vmax.f32 %v484, 0.0
  %v489 = vmax.f32 %v485, 0.0
  %vm490 = vcmask 588800
  %491 = vst.msk [vmem:[%s3] sm:$0xff] %vm490, %v486
  %492 = vst.msk [vmem:[%s3 + $0x8] sm:$0xff] %vm490, %v487
  %493 = vst.msk [vmem:[%s3 + $0x10] sm:$0xff] %vm490, %v488
  %494 = vst.msk [vmem:[%s3 + $0x18] sm:$0xff] %vm490, %v489
  // Predicated region
  $region14: #{basic_cnn_forward.4} parent=0 // pred_check
    _
  $region15: #{basic_cnn_forward.4} parent=0 // pred_check_branch
    %496 = sbr.rel (0) target = $region17
  $region16: #{basic_cnn_forward.4} parent=0 // pred_region
    _
  $region17: #{basic_cnn_forward.4} parent=0 // pred_fallthru
    _
  // Predicated region
  $region18: #{basic_cnn_forward.4} parent=0 // pred_check
    _
  $region19: #{basic_cnn_forward.4} parent=0 // pred_check_branch
    %498 = sbr.rel (0) target = $region21
  $region20: #{basic_cnn_forward.4} parent=0 // pred_region
    _
  $region21: #{basic_cnn_forward.4} parent=0 // pred_fallthru
    _

// kernel: basic_cnn_forward.5
$region0: #{basic_cnn_forward.5}
  #allocation0 [shape = 'u32[]', space=smem, size = 0x4, offset = 0x4, fixed_abs, tag = 'smem constant byte address 0x4 - core index']
  #allocation1 [shape = 'u32[144,128]{1,0:T(1,128)}', space=vmem, size = 0x12000, scoped, tag = 'internal scratch']
  %s0 = inlined_call_operand.vmem [shape: f32[288,32], index: 0, kind: input, shape index: {}]
  %s1 = inlined_call_operand.vmem [shape: f32[64,288], index: 1, kind: input, shape index: {}]
  %s2 = inlined_call_operand.vmem [shape: f32[64,1], index: 2, kind: input, shape index: {}]
  %s3 = inlined_call_operand.vmem [shape: f32[32,2], index: 3, kind: input, shape index: {}]
  %s4 = inlined_call_operand.vmem [shape: f32[32,64], index: 4, kind: input, shape index: {}]
  %s5 = inlined_call_operand.vmem [shape: f32[32,1], index: 5, kind: input, shape index: {}]
  %s6 = inlined_call_operand.vmem [shape: f32[10,32], index: 6, kind: input, shape index: {}]
  %s7 = inlined_call_operand.vmem [shape: f32[10,1], index: 7, kind: input, shape index: {}]
  %s8 = inlined_call_operand.vmem [shape: f32[10,2], index: 8, kind: output, shape index: {}]
  %s9 = sld [smem:[#allocation0]]
  $region42: #{basic_cnn_forward.5} parent=0
    _
  %s11 = ssub.s32 1, %s9
  %s12 = scalar_select 0, %s11, %s9
  // Predicated region
  $region2: #{basic_cnn_forward.5} parent=0 // pred_check
    _
  $region3: #{basic_cnn_forward.5} parent=0 // pred_check_branch
    %14 = sbr.rel (0) target = $region5
  $region4: #{basic_cnn_forward.5} parent=0 // pred_region
    _
  $region5: #{basic_cnn_forward.5} parent=0 // pred_fallthru
    _
  // Predicated region
  $region6: #{basic_cnn_forward.5} parent=0 // pred_check
    _
  $region7: #{basic_cnn_forward.5} parent=0 // pred_check_branch
    %16 = sbr.rel (0) target = $region9
  $region8: #{basic_cnn_forward.5} parent=0 // pred_region
    _
  $region9: #{basic_cnn_forward.5} parent=0 // pred_fallthru
    _
  // Predicated region
  $region10: #{basic_cnn_forward.5} parent=0 // pred_check
    _
  $region11: #{basic_cnn_forward.5} parent=0 // pred_check_branch
    %18 = sbr.rel (0) target = $region13
  $region12: #{basic_cnn_forward.5} parent=0 // pred_region
    _
  $region13: #{basic_cnn_forward.5} parent=0 // pred_fallthru
    _
  // Predicated region
  $region14: #{basic_cnn_forward.5} parent=0 // pred_check
    _
  $region15: #{basic_cnn_forward.5} parent=0 // pred_check_branch
    %20 = sbr.rel (0) target = $region17
  $region16: #{basic_cnn_forward.5} parent=0 // pred_region
    _
  $region17: #{basic_cnn_forward.5} parent=0 // pred_fallthru
    _
  // Predicated region
  $region18: #{basic_cnn_forward.5} parent=0 // pred_check
    _
  $region19: #{basic_cnn_forward.5} parent=0 // pred_check_branch
    %22 = sbr.rel (0) target = $region21
  $region20: #{basic_cnn_forward.5} parent=0 // pred_region
    _
  $region21: #{basic_cnn_forward.5} parent=0 // pred_fallthru
    _
  // Predicated region
  $region22: #{basic_cnn_forward.5} parent=0 // pred_check
    _
  $region23: #{basic_cnn_forward.5} parent=0 // pred_check_branch
    %24 = sbr.rel (0) target = $region25
  $region24: #{basic_cnn_forward.5} parent=0 // pred_region
    _
  $region25: #{basic_cnn_forward.5} parent=0 // pred_fallthru
    _
  // Predicated region
  $region26: #{basic_cnn_forward.5} parent=0 // pred_check
    _
  $region27: #{basic_cnn_forward.5} parent=0 // pred_check_branch
    %26 = sbr.rel (0) target = $region29
  $region28: #{basic_cnn_forward.5} parent=0 // pred_region
    _
  $region29: #{basic_cnn_forward.5} parent=0 // pred_fallthru
    _
  // Predicated region
  $region30: #{basic_cnn_forward.5} parent=0 // pred_check
    _
  $region31: #{basic_cnn_forward.5} parent=0 // pred_check_branch
    %28 = sbr.rel (0) target = $region33
  $region32: #{basic_cnn_forward.5} parent=0 // pred_region
    _
  $region33: #{basic_cnn_forward.5} parent=0 // pred_fallthru
    _
  %v29 = vld [vmem:[%s1] sm:$0xff]
  %v30 = vld [vmem:[%s1 + $0x8] sm:$0xff]
  %v31 = vld [vmem:[%s1 + $0x10] sm:$0xff]
  %v32 = vld [vmem:[%s1 + $0x18] sm:$0xff]
  %v33 = vld [vmem:[%s1 + $0x20] sm:$0xff]
  %v34 = vld [vmem:[%s1 + $0x28] sm:$0xff]
  %v35 = vld [vmem:[%s1 + $0x30] sm:$0xff]
  %v36 = vld [vmem:[%s1 + $0x38] sm:$0xff]
  %v37 = vld [vmem:[%s1 + $0x40] sm:$0xff]
  %v38 = vld [vmem:[%s1 + $0x48] sm:$0xff]
  %v39 = vld [vmem:[%s1 + $0x50] sm:$0xff]
  %v40 = vld [vmem:[%s1 + $0x58] sm:$0xff]
  %v41 = vld [vmem:[%s1 + $0x60] sm:$0xff]
  %v42 = vld [vmem:[%s1 + $0x68] sm:$0xff]
  %v43 = vld [vmem:[%s1 + $0x70] sm:$0xff]
  %v44 = vld [vmem:[%s1 + $0x78] sm:$0xff]
  %v45 = vld [vmem:[%s1 + $0x80] sm:$0xff]
  %v46 = vld [vmem:[%s1 + $0x88] sm:$0xff]
  %v47 = vld [vmem:[%s1 + $0x90] sm:$0xff]
  %v48 = vld [vmem:[%s1 + $0x98] sm:$0xff]
  %v49 = vld [vmem:[%s1 + $0xa0] sm:$0xff]
  %v50 = vld [vmem:[%s1 + $0xa8] sm:$0xff]
  %v51 = vld [vmem:[%s1 + $0xb0] sm:$0xff]
  %v52 = vld [vmem:[%s1 + $0xb8] sm:$0xff]
  %v53 = vld [vmem:[%s0] sm:$0xff]
  %v54 = vld [vmem:[%s0 + $0x8] sm:$0xff]
  %v55 = vld [vmem:[%s0 + $0x10] sm:$0xff]
  %v56 = vld [vmem:[%s0 + $0x18] sm:$0xff]
  %v57 = vld [vmem:[%s0 + $0x20] sm:$0xff]
  %v58 = vld [vmem:[%s0 + $0x28] sm:$0xff]
  %v59 = vld [vmem:[%s0 + $0x30] sm:$0xff]
  %v60 = vld [vmem:[%s0 + $0x38] sm:$0xff]
  %v61 = vld [vmem:[%s0 + $0x40] sm:$0xff]
  %v62 = vld [vmem:[%s0 + $0x48] sm:$0xff]
  %v63 = vld [vmem:[%s0 + $0x50] sm:$0xff]
  %v64 = vld [vmem:[%s0 + $0x58] sm:$0xff]
  %v65 = vld [vmem:[%s0 + $0x60] sm:$0xff]
  %v66 = vld [vmem:[%s0 + $0x68] sm:$0xff]
  %v67 = vld [vmem:[%s0 + $0x70] sm:$0xff]
  %v68 = vld [vmem:[%s0 + $0x78] sm:$0xff]
  %v69 = vld [vmem:[%s0 + $0x80] sm:$0xff]
  %v70 = vld [vmem:[%s0 + $0x88] sm:$0xff]
  %v71 = vld [vmem:[%s0 + $0x90] sm:$0xff]
  %v72 = vld [vmem:[%s0 + $0x98] sm:$0xff]
  %v73 = vld [vmem:[%s0 + $0xa0] sm:$0xff]
  %v74 = vld [vmem:[%s0 + $0xa8] sm:$0xff]
  %v75 = vld [vmem:[%s0 + $0xb0] sm:$0xff]
  %v76 = vld [vmem:[%s0 + $0xb8] sm:$0xff]
  %v77 = vld [vmem:[%s0 + $0xc0] sm:$0xff]
  %v78 = vld [vmem:[%s0 + $0xc8] sm:$0xff]
  %v79 = vld [vmem:[%s0 + $0xd0] sm:$0xff]
  %v80 = vld [vmem:[%s0 + $0xd8] sm:$0xff]
  %v81 = vld [vmem:[%s0 + $0xe0] sm:$0xff]
  %v82 = vld [vmem:[%s0 + $0xe8] sm:$0xff]
  %v83 = vld [vmem:[%s0 + $0xf0] sm:$0xff]
  %v84 = vld [vmem:[%s0 + $0xf8] sm:$0xff]
  %v85 = vld [vmem:[%s0 + $0x100] sm:$0xff]
  %v86 = vld [vmem:[%s0 + $0x108] sm:$0xff]
  %v87 = vld [vmem:[%s0 + $0x110] sm:$0xff]
  %v88 = vld [vmem:[%s0 + $0x118] sm:$0xff]
  %v89 = vld [vmem:[%s2] sm:$0xff]
  %v90 = vld [vmem:[%s2 + $0x8] sm:$0xff]
  %v91 = vld [vmem:[%s2 + $0x10] sm:$0xff]
  %v92 = vld [vmem:[%s2 + $0x18] sm:$0xff]
  %v93 = vld [vmem:[%s2 + $0x20] sm:$0xff]
  %v94 = vld [vmem:[%s2 + $0x28] sm:$0xff]
  %v95 = vld [vmem:[%s2 + $0x30] sm:$0xff]
  %v96 = vld [vmem:[%s2 + $0x38] sm:$0xff]
  %98 = vset.pattern.permute.xlu0 0
  %99 = vperm.xlu0 %98, %v89
  %v100 = vpop.permute.xlu0 %99
  %103 = vset.pattern.permute.xlu0 0
  %104 = vperm.xlu0 %103, %v90
  %v105 = vpop.permute.xlu0 %104
  %108 = vset.pattern.permute.xlu0 0
  %109 = vperm.xlu0 %108, %v91
  %v110 = vpop.permute.xlu0 %109
  %113 = vset.pattern.permute.xlu0 0
  %114 = vperm.xlu0 %113, %v92
  %v115 = vpop.permute.xlu0 %114
  %118 = vset.pattern.permute.xlu0 0
  %119 = vperm.xlu0 %118, %v93
  %v120 = vpop.permute.xlu0 %119
  %123 = vset.pattern.permute.xlu0 0
  %124 = vperm.xlu0 %123, %v94
  %v125 = vpop.permute.xlu0 %124
  %128 = vset.pattern.permute.xlu0 0
  %129 = vperm.xlu0 %128, %v95
  %v130 = vpop.permute.xlu0 %129
  %133 = vset.pattern.permute.xlu0 0
  %134 = vperm.xlu0 %133, %v96
  %v135 = vpop.permute.xlu0 %134
  %vm137 = vcmask 261120
  %v139 = vsel %vm137, %v31, 0
  %v142 = vsel %vm137, %v34, 0
  %v145 = vsel %vm137, %v37, 0
  %v148 = vsel %vm137, %v40, 0
  %v151 = vsel %vm137, %v43, 0
  %v154 = vsel %vm137, %v46, 0
  %v157 = vsel %vm137, %v49, 0
  %v160 = vsel %vm137, %v52, 0
  %162 = vmatprep.subr.mxu0 0.0
  %163 = vmatpush1.msra.mxu0 %v53
  %164 = vmatprep.subr.mxu0 0.0
  %165 = vmatpush1.msra.mxu0 %v54
  %166 = vmatprep.subr.mxu0 0.0
  %167 = vmatpush1.msra.mxu0 %v55
  %168 = vmatprep.subr.mxu0 0.0
  %169 = vmatpush1.msra.mxu0 %v56
  %170 = vmatprep.subr.mxu0 0.0
  %171 = vmatpush1.msra.mxu0 %v57
  %172 = vmatprep.subr.mxu0 0.0
  %173 = vmatpush1.msra.mxu0 %v58
  %174 = vmatprep.subr.mxu0 0.0
  %175 = vmatpush1.msra.mxu0 %v59
  %176 = vmatprep.subr.mxu0 0.0
  %177 = vmatpush1.msra.mxu0 %v60
  %178 = vmatprep.subr.mxu0 0.0
  %179 = vmatpush1.msra.mxu0 %v61
  %180 = vmatprep.subr.mxu0 0.0
  %181 = vmatpush1.msra.mxu0 %v62
  %182 = vmatprep.subr.mxu0 0.0
  %183 = vmatpush1.msra.mxu0 %v63
  %184 = vmatprep.subr.mxu0 0.0
  %185 = vmatpush1.msra.mxu0 %v64
  %186 = vmatprep.subr.mxu0 0.0
  %187 = vmatpush1.msra.mxu0 %v65
  %188 = vmatprep.subr.mxu0 0.0
  %189 = vmatpush1.msra.mxu0 %v66
  %190 = vmatprep.subr.mxu0 0.0
  %191 = vmatpush1.msra.mxu0 %v67
  %192 = vmatprep.subr.mxu0 0.0
  %193 = vmatpush1.msra.mxu0 %v68
  %194 = vmatprep.subr.mxu0 0.0
  %195 = vmatpush1.msra.mxu0 %v69
  %196 = vmatprep.subr.mxu0 0.0
  %197 = vmatpush1.msra.mxu0 %v70
  %198 = vmatprep.subr.mxu0 0.0
  %199 = vmatpush1.msra.mxu0 %v71
  %200 = vmatprep.subr.mxu0 0.0
  %201 = vmatpush1.msra.mxu0 %v72
  %202 = vmatprep.subr.mxu0 0.0
  %203 = vmatpush1.msra.mxu0 %v73
  %204 = vmatprep.subr.mxu0 0.0
  %205 = vmatpush1.msra.mxu0 %v74
  %206 = vmatprep.subr.mxu0 0.0
  %207 = vmatpush1.msra.mxu0 %v75
  %208 = vmatprep.subr.mxu0 0.0
  %209 = vmatpush1.msra.mxu0 %v76
  %210 = vmatprep.subr.mxu0 0.0
  %211 = vmatpush1.msra.mxu0 %v77
  %212 = vmatprep.subr.mxu0 0.0
  %213 = vmatpush1.msra.mxu0 %v78
  %214 = vmatprep.subr.mxu0 0.0
  %215 = vmatpush1.msra.mxu0 %v79
  %216 = vmatprep.subr.mxu0 0.0
  %217 = vmatpush1.msra.mxu0 %v80
  %218 = vmatprep.subr.mxu0 0.0
  %219 = vmatpush1.msra.mxu0 %v81
  %220 = vmatprep.subr.mxu0 0.0
  %221 = vmatpush1.msra.mxu0 %v82
  %222 = vmatprep.subr.mxu0 0.0
  %223 = vmatpush1.msra.mxu0 %v83
  %224 = vmatprep.subr.mxu0 0.0
  %225 = vmatpush1.msra.mxu0 %v84
  %226 = vmatprep.mubr.f32.mxu0 %v30
  %227 = vmatmul.mubr.f32.gmra.mrb[0].mxu0 %v29
  %v228 = vpop.f32.mrb[0].mxu0
  %v229 = vadd.f32 %v100, %v228
  %v230 = vpop.f32.mrb[0].mxu0
  %231 = vmatprep.mubr.f32.mxu0 %v33
  %232 = vmatmul.mubr.f32.gmra.mrb[0].mxu0 %v32
  %v233 = vpop.f32.mrb[0].mxu0
  %v234 = vadd.f32 %v105, %v233
  %v235 = vpop.f32.mrb[0].mxu0
  %236 = vmatprep.mubr.f32.mxu0 %v36
  %237 = vmatmul.mubr.f32.gmra.mrb[0].mxu0 %v35
  %v238 = vpop.f32.mrb[0].mxu0
  %v239 = vadd.f32 %v110, %v238
  %v240 = vpop.f32.mrb[0].mxu0
  %241 = vmatprep.mubr.f32.mxu0 %v39
  %242 = vmatmul.mubr.f32.gmra.mrb[0].mxu0 %v38
  %v243 = vpop.f32.mrb[0].mxu0
  %v244 = vadd.f32 %v115, %v243
  %v245 = vpop.f32.mrb[0].mxu0
  %246 = vmatprep.mubr.f32.mxu0 %v42
  %247 = vmatmul.mubr.f32.gmra.mrb[0].mxu0 %v41
  %v248 = vpop.f32.mrb[0].mxu0
  %v249 = vadd.f32 %v120, %v248
  %v250 = vpop.f32.mrb[0].mxu0
  %251 = vmatprep.mubr.f32.mxu0 %v45
  %252 = vmatmul.mubr.f32.gmra.mrb[0].mxu0 %v44
  %v253 = vpop.f32.mrb[0].mxu0
  %v254 = vadd.f32 %v125, %v253
  %v255 = vpop.f32.mrb[0].mxu0
  %256 = vmatprep.mubr.f32.mxu0 %v48
  %257 = vmatmul.mubr.f32.gmra.mrb[0].mxu0 %v47
  %v258 = vpop.f32.mrb[0].mxu0
  %v259 = vadd.f32 %v130, %v258
  %v260 = vpop.f32.mrb[0].mxu0
  %261 = vmatprep.mubr.f32.mxu0 %v51
  %262 = vmatmul.mubr.f32.gmra.mrb[0].mxu0 %v50
  %v263 = vpop.f32.mrb[0].mxu0
  %v264 = vadd.f32 %v135, %v263
  %v265 = vpop.f32.mrb[0].mxu0
  %266 = vdwg.mxu0
  %267 = vmatprep.subr.mxu0 0.0
  %268 = vmatpush1.msra.mxu0 %v85
  %269 = vmatprep.subr.mxu0 0.0
  %270 = vmatpush1.msra.mxu0 %v86
  %271 = vmatprep.subr.mxu0 0.0
  %272 = vmatpush1.msra.mxu0 %v87
  %273 = vmatprep.subr.mxu0 0.0
  %274 = vmatpush1.msra.mxu0 %v88
  %275 = vmatprep.subr.mxu0 0.0
  %276 = vmatpush1.msra.mxu0 0.0
  %277 = vmatprep.subr.mxu0 0.0
  %278 = vmatpush1.msra.mxu0 0.0
  %279 = vmatprep.subr.mxu0 0.0
  %280 = vmatpush1.msra.mxu0 0.0
  %281 = vmatprep.subr.mxu0 0.0
  %282 = vmatpush1.msra.mxu0 0.0
  %283 = vmatprep.subr.mxu0 0.0
  %284 = vmatpush1.msra.mxu0 0.0
  %285 = vmatprep.subr.mxu0 0.0
  %286 = vmatpush1.msra.mxu0 0.0
  %287 = vmatprep.subr.mxu0 0.0
  %288 = vmatpush1.msra.mxu0 0.0
  %289 = vmatprep.subr.mxu0 0.0
  %290 = vmatpush1.msra.mxu0 0.0
  %291 = vmatprep.subr.mxu0 0.0
  %292 = vmatpush1.msra.mxu0 0.0
  %293 = vmatprep.subr.mxu0 0.0
  %294 = vmatpush1.msra.mxu0 0.0
  %295 = vmatprep.subr.mxu0 0.0
  %296 = vmatpush1.msra.mxu0 0.0
  %297 = vmatprep.subr.mxu0 0.0
  %298 = vmatpush1.msra.mxu0 0.0
  %299 = vmatprep.subr.mxu0 0.0
  %300 = vmatpush1.msra.mxu0 0.0
  %301 = vmatprep.subr.mxu0 0.0
  %302 = vmatpush1.msra.mxu0 0.0
  %303 = vmatprep.subr.mxu0 0.0
  %304 = vmatpush1.msra.mxu0 0.0
  %305 = vmatprep.subr.mxu0 0.0
  %306 = vmatpush1.msra.mxu0 0.0
  %307 = vmatprep.subr.mxu0 0.0
  %308 = vmatpush1.msra.mxu0 0.0
  %309 = vmatprep.subr.mxu0 0.0
  %310 = vmatpush1.msra.mxu0 0.0
  %311 = vmatprep.subr.mxu0 0.0
  %312 = vmatpush1.msra.mxu0 0.0
  %313 = vmatprep.subr.mxu0 0.0
  %314 = vmatpush1.msra.mxu0 0.0
  %315 = vmatprep.subr.mxu0 0.0
  %316 = vmatpush1.msra.mxu0 0.0
  %317 = vmatprep.subr.mxu0 0.0
  %318 = vmatpush1.msra.mxu0 0.0
  %319 = vmatprep.subr.mxu0 0.0
  %320 = vmatpush1.msra.mxu0 0.0
  %321 = vmatprep.subr.mxu0 0.0
  %322 = vmatpush1.msra.mxu0 0.0
  %323 = vmatprep.subr.mxu0 0.0
  %324 = vmatpush1.msra.mxu0 0.0
  %325 = vmatprep.subr.mxu0 0.0
  %326 = vmatpush1.msra.mxu0 0.0
  %327 = vmatprep.subr.mxu0 0.0
  %328 = vmatpush1.msra.mxu0 0.0
  %329 = vmatprep.subr.mxu0 0.0
  %330 = vmatpush1.msra.mxu0 0.0
  %331 = vmatprep.mubr.f32.mxu0 0.0
  %332 = vmatmul.mubr.f32.gmra.mrb[0].mxu0 %v139
  %v333 = vpop.f32.mrb[0].mxu0
  %v334 = vadd.f32 %v229, %v333
  %v335 = vpop.f32.mrb[0].mxu0
  %336 = vmatprep.mubr.f32.mxu0 0.0
  %337 = vmatmul.mubr.f32.gmra.mrb[0].mxu0 %v142
  %v338 = vpop.f32.mrb[0].mxu0
  %v339 = vadd.f32 %v234, %v338
  %v340 = vpop.f32.mrb[0].mxu0
  %341 = vmatprep.mubr.f32.mxu0 0.0
  %342 = vmatmul.mubr.f32.gmra.mrb[0].mxu0 %v145
  %v343 = vpop.f32.mrb[0].mxu0
  %v344 = vadd.f32 %v239, %v343
  %v345 = vpop.f32.mrb[0].mxu0
  %346 = vmatprep.mubr.f32.mxu0 0.0
  %347 = vmatmul.mubr.f32.gmra.mrb[0].mxu0 %v148
  %v348 = vpop.f32.mrb[0].mxu0
  %v349 = vadd.f32 %v244, %v348
  %v350 = vpop.f32.mrb[0].mxu0
  %351 = vmatprep.mubr.f32.mxu0 0.0
  %352 = vmatmul.mubr.f32.gmra.mrb[0].mxu0 %v151
  %v353 = vpop.f32.mrb[0].mxu0
  %v354 = vadd.f32 %v249, %v353
  %v355 = vpop.f32.mrb[0].mxu0
  %356 = vmatprep.mubr.f32.mxu0 0.0
  %357 = vmatmul.mubr.f32.gmra.mrb[0].mxu0 %v154
  %v358 = vpop.f32.mrb[0].mxu0
  %v359 = vadd.f32 %v254, %v358
  %v360 = vpop.f32.mrb[0].mxu0
  %361 = vmatprep.mubr.f32.mxu0 0.0
  %362 = vmatmul.mubr.f32.gmra.mrb[0].mxu0 %v157
  %v363 = vpop.f32.mrb[0].mxu0
  %v364 = vadd.f32 %v259, %v363
  %v365 = vpop.f32.mrb[0].mxu0
  %366 = vmatprep.mubr.f32.mxu0 0.0
  %367 = vmatmul.mubr.f32.gmra.mrb[0].mxu0 %v160
  %v368 = vpop.f32.mrb[0].mxu0
  %v369 = vadd.f32 %v264, %v368
  %v370 = vpop.f32.mrb[0].mxu0
  %371 = vdwg.mxu0
  %v372 = vld [vmem:[%s3] sm:$0xff]
  %v373 = vld [vmem:[%s3 + $0x8] sm:$0xff]
  %v374 = vld [vmem:[%s3 + $0x10] sm:$0xff]
  %v375 = vld [vmem:[%s3 + $0x18] sm:$0xff]
  %v377 = vsel %vm137, %v334, 0
  %v380 = vsel %vm137, %v339, 0
  %v383 = vsel %vm137, %v344, 0
  %v386 = vsel %vm137, %v349, 0
  %v389 = vsel %vm137, %v354, 0
  %v392 = vsel %vm137, %v359, 0
  %v395 = vsel %vm137, %v364, 0
  %v398 = vsel %vm137, %v369, 0
  %400 = vmatprep.subr.mxu0 0.0
  %401 = vmatpush1.msra.mxu0 %v372
  %402 = vmatprep.subr.mxu0 0.0
  %403 = vmatpush1.msra.mxu0 %v373
  %404 = vmatprep.subr.mxu0 0.0
  %405 = vmatpush1.msra.mxu0 %v374
  %406 = vmatprep.subr.mxu0 0.0
  %407 = vmatpush1.msra.mxu0 %v375
  %408 = vmatprep.subr.mxu0 0.0
  %409 = vmatpush1.msra.mxu0 0.0
  %410 = vmatprep.subr.mxu0 0.0
  %411 = vmatpush1.msra.mxu0 0.0
  %412 = vmatprep.subr.mxu0 0.0
  %413 = vmatpush1.msra.mxu0 0.0
  %414 = vmatprep.subr.mxu0 0.0
  %415 = vmatpush1.msra.mxu0 0.0
  %416 = vmatprep.subr.mxu0 0.0
  %417 = vmatpush1.msra.mxu0 0.0
  %418 = vmatprep.subr.mxu0 0.0
  %419 = vmatpush1.msra.mxu0 0.0
  %420 = vmatprep.subr.mxu0 0.0
  %421 = vmatpush1.msra.mxu0 0.0
  %422 = vmatprep.subr.mxu0 0.0
  %423 = vmatpush1.msra.mxu0 0.0
  %424 = vmatprep.subr.mxu0 0.0
  %425 = vmatpush1.msra.mxu0 0.0
  %426 = vmatprep.subr.mxu0 0.0
  %427 = vmatpush1.msra.mxu0 0.0
  %428 = vmatprep.subr.mxu0 0.0
  %429 = vmatpush1.msra.mxu0 0.0
  %430 = vmatprep.subr.mxu0 0.0
  %431 = vmatpush1.msra.mxu0 0.0
  %432 = vmatprep.subr.mxu0 0.0
  %433 = vmatpush1.msra.mxu0 0.0
  %434 = vmatprep.subr.mxu0 0.0
  %435 = vmatpush1.msra.mxu0 0.0
  %436 = vmatprep.subr.mxu0 0.0
  %437 = vmatpush1.msra.mxu0 0.0
  %438 = vmatprep.subr.mxu0 0.0
  %439 = vmatpush1.msra.mxu0 0.0
  %440 = vmatprep.subr.mxu0 0.0
  %441 = vmatpush1.msra.mxu0 0.0
  %442 = vmatprep.subr.mxu0 0.0
  %443 = vmatpush1.msra.mxu0 0.0
  %444 = vmatprep.subr.mxu0 0.0
  %445 = vmatpush1.msra.mxu0 0.0
  %446 = vmatprep.subr.mxu0 0.0
  %447 = vmatpush1.msra.mxu0 0.0
  %448 = vmatprep.subr.mxu0 0.0
  %449 = vmatpush1.msra.mxu0 0.0
  %450 = vmatprep.subr.mxu0 0.0
  %451 = vmatpush1.msra.mxu0 0.0
  %452 = vmatprep.subr.mxu0 0.0
  %453 = vmatpush1.msra.mxu0 0.0
  %454 = vmatprep.subr.mxu0 0.0
  %455 = vmatpush1.msra.mxu0 0.0
  %456 = vmatprep.subr.mxu0 0.0
  %457 = vmatpush1.msra.mxu0 0.0
  %458 = vmatprep.subr.mxu0 0.0
  %459 = vmatpush1.msra.mxu0 0.0
  %460 = vmatprep.subr.mxu0 0.0
  %461 = vmatpush1.msra.mxu0 0.0
  %462 = vmatprep.subr.mxu0 0.0
  %463 = vmatpush1.msra.mxu0 0.0
  %464 = vmatprep.mubr.f32.mxu0 0.0
  %465 = vmatmul.mubr.f32.gmra.mrb[0].mxu0 %v377
  %v466 = vpop.f32.mrb[0].mxu0
  %v467 = vadd.f32 0.0, %v466
  %v468 = vpop.f32.mrb[0].mxu0
  %469 = vmatprep.mubr.f32.mxu0 0.0
  %470 = vmatmul.mubr.f32.gmra.mrb[0].mxu0 %v380
  %v471 = vpop.f32.mrb[0].mxu0
  %v472 = vadd.f32 0.0, %v471
  %v473 = vpop.f32.mrb[0].mxu0
  %474 = vmatprep.mubr.f32.mxu0 0.0
  %475 = vmatmul.mubr.f32.gmra.mrb[0].mxu0 %v383
  %v476 = vpop.f32.mrb[0].mxu0
  %v477 = vadd.f32 0.0, %v476
  %v478 = vpop.f32.mrb[0].mxu0
  %479 = vmatprep.mubr.f32.mxu0 0.0
  %480 = vmatmul.mubr.f32.gmra.mrb[0].mxu0 %v386
  %v481 = vpop.f32.mrb[0].mxu0
  %v482 = vadd.f32 0.0, %v481
  %v483 = vpop.f32.mrb[0].mxu0
  %484 = vmatprep.mubr.f32.mxu0 0.0
  %485 = vmatmul.mubr.f32.gmra.mrb[0].mxu0 %v389
  %v486 = vpop.f32.mrb[0].mxu0
  %v487 = vadd.f32 0.0, %v486
  %v488 = vpop.f32.mrb[0].mxu0
  %489 = vmatprep.mubr.f32.mxu0 0.0
  %490 = vmatmul.mubr.f32.gmra.mrb[0].mxu0 %v392
  %v491 = vpop.f32.mrb[0].mxu0
  %v492 = vadd.f32 0.0, %v491
  %v493 = vpop.f32.mrb[0].mxu0
  %494 = vmatprep.mubr.f32.mxu0 0.0
  %495 = vmatmul.mubr.f32.gmra.mrb[0].mxu0 %v395
  %v496 = vpop.f32.mrb[0].mxu0
  %v497 = vadd.f32 0.0, %v496
  %v498 = vpop.f32.mrb[0].mxu0
  %499 = vmatprep.mubr.f32.mxu0 0.0
  %500 = vmatmul.mubr.f32.gmra.mrb[0].mxu0 %v398
  %v501 = vpop.f32.mrb[0].mxu0
  %v502 = vadd.f32 0.0, %v501
  %v503 = vpop.f32.mrb[0].mxu0
  %504 = vdwg.mxu0
  %v505 = vld [vmem:[%s4] sm:$0xff]
  %v506 = vld [vmem:[%s4 + $0x8] sm:$0xff]
  %v507 = vld [vmem:[%s4 + $0x10] sm:$0xff]
  %v508 = vld [vmem:[%s4 + $0x18] sm:$0xff]
  %v509 = vld [vmem:[%s5] sm:$0xff]
  %v510 = vld [vmem:[%s5 + $0x8] sm:$0xff]
  %v511 = vld [vmem:[%s5 + $0x10] sm:$0xff]
  %v512 = vld [vmem:[%s5 + $0x18] sm:$0xff]
  %514 = vset.pattern.permute.xlu0 0
  %515 = vperm.xlu0 %514, %v509
  %v516 = vpop.permute.xlu0 %515
  %519 = vset.pattern.permute.xlu0 0
  %520 = vperm.xlu0 %519, %v510
  %v521 = vpop.permute.xlu0 %520
  %524 = vset.pattern.permute.xlu0 0
  %525 = vperm.xlu0 %524, %v511
  %v526 = vpop.permute.xlu0 %525
  %529 = vset.pattern.permute.xlu0 0
  %530 = vperm.xlu0 %529, %v512
  %v531 = vpop.permute.xlu0 %530
  %vm533 = vcmask 523264
  %v535 = vsel %vm533, %v505, 0
  %v538 = vsel %vm533, %v506, 0
  %v541 = vsel %vm533, %v507, 0
  %v544 = vsel %vm533, %v508, 0
  %546 = vmatprep.subr.mxu0 0.0
  %547 = vmatpush1.msra.mxu0 %v467
  %548 = vmatprep.subr.mxu0 0.0
  %549 = vmatpush1.msra.mxu0 %v472
  %550 = vmatprep.subr.mxu0 0.0
  %551 = vmatpush1.msra.mxu0 %v477
  %552 = vmatprep.subr.mxu0 0.0
  %553 = vmatpush1.msra.mxu0 %v482
  %554 = vmatprep.subr.mxu0 0.0
  %555 = vmatpush1.msra.mxu0 %v487
  %556 = vmatprep.subr.mxu0 0.0
  %557 = vmatpush1.msra.mxu0 %v492
  %558 = vmatprep.subr.mxu0 0.0
  %559 = vmatpush1.msra.mxu0 %v497
  %560 = vmatprep.subr.mxu0 0.0
  %561 = vmatpush1.msra.mxu0 %v502
  %562 = vmatprep.subr.mxu0 0.0
  %563 = vmatpush1.msra.mxu0 0.0
  %564 = vmatprep.subr.mxu0 0.0
  %565 = vmatpush1.msra.mxu0 0.0
  %566 = vmatprep.subr.mxu0 0.0
  %567 = vmatpush1.msra.mxu0 0.0
  %568 = vmatprep.subr.mxu0 0.0
  %569 = vmatpush1.msra.mxu0 0.0
  %570 = vmatprep.subr.mxu0 0.0
  %571 = vmatpush1.msra.mxu0 0.0
  %572 = vmatprep.subr.mxu0 0.0
  %573 = vmatpush1.msra.mxu0 0.0
  %574 = vmatprep.subr.mxu0 0.0
  %575 = vmatpush1.msra.mxu0 0.0
  %576 = vmatprep.subr.mxu0 0.0
  %577 = vmatpush1.msra.mxu0 0.0
  %578 = vmatprep.subr.mxu0 0.0
  %579 = vmatpush1.msra.mxu0 0.0
  %580 = vmatprep.subr.mxu0 0.0
  %581 = vmatpush1.msra.mxu0 0.0
  %582 = vmatprep.subr.mxu0 0.0
  %583 = vmatpush1.msra.mxu0 0.0
  %584 = vmatprep.subr.mxu0 0.0
  %585 = vmatpush1.msra.mxu0 0.0
  %586 = vmatprep.subr.mxu0 0.0
  %587 = vmatpush1.msra.mxu0 0.0
  %588 = vmatprep.subr.mxu0 0.0
  %589 = vmatpush1.msra.mxu0 0.0
  %590 = vmatprep.subr.mxu0 0.0
  %591 = vmatpush1.msra.mxu0 0.0
  %592 = vmatprep.subr.mxu0 0.0
  %593 = vmatpush1.msra.mxu0 0.0
  %594 = vmatprep.subr.mxu0 0.0
  %595 = vmatpush1.msra.mxu0 0.0
  %596 = vmatprep.subr.mxu0 0.0
  %597 = vmatpush1.msra.mxu0 0.0
  %598 = vmatprep.subr.mxu0 0.0
  %599 = vmatpush1.msra.mxu0 0.0
  %600 = vmatprep.subr.mxu0 0.0
  %601 = vmatpush1.msra.mxu0 0.0
  %602 = vmatprep.subr.mxu0 0.0
  %603 = vmatpush1.msra.mxu0 0.0
  %604 = vmatprep.subr.mxu0 0.0
  %605 = vmatpush1.msra.mxu0 0.0
  %606 = vmatprep.subr.mxu0 0.0
  %607 = vmatpush1.msra.mxu0 0.0
  %608 = vmatprep.subr.mxu0 0.0
  %609 = vmatpush1.msra.mxu0 0.0
  %610 = vmatprep.mubr.f32.mxu0 0.0
  %611 = vmatmul.mubr.f32.gmra.mrb[0].mxu0 %v535
  %v612 = vpop.f32.mrb[0].mxu0
  %v613 = vadd.f32 %v516, %v612
  %v614 = vpop.f32.mrb[0].mxu0
  %615 = vmatprep.mubr.f32.mxu0 0.0
  %616 = vmatmul.mubr.f32.gmra.mrb[0].mxu0 %v538
  %v617 = vpop.f32.mrb[0].mxu0
  %v618 = vadd.f32 %v521, %v617
  %v619 = vpop.f32.mrb[0].mxu0
  %620 = vmatprep.mubr.f32.mxu0 0.0
  %621 = vmatmul.mubr.f32.gmra.mrb[0].mxu0 %v541
  %v622 = vpop.f32.mrb[0].mxu0
  %v623 = vadd.f32 %v526, %v622
  %v624 = vpop.f32.mrb[0].mxu0
  %625 = vmatprep.mubr.f32.mxu0 0.0
  %626 = vmatmul.mubr.f32.gmra.mrb[0].mxu0 %v544
  %v627 = vpop.f32.mrb[0].mxu0
  %v628 = vadd.f32 %v531, %v627
  %v629 = vpop.f32.mrb[0].mxu0
  %630 = vdwg.mxu0
  %v631 = vmax.f32 %v613, 0.0
  %v632 = vmax.f32 %v618, 0.0
  %v633 = vmax.f32 %v623, 0.0
  %v634 = vmax.f32 %v628, 0.0
  %v635 = vld [vmem:[%s6] sm:$0xff]
  %v636 = vld [vmem:[%s6 + $0x8] sm:$0x3]
  %v637 = vld [vmem:[%s7] sm:$0xff]
  %v638 = vld [vmem:[%s7 + $0x8] sm:$0x3]
  %640 = vset.pattern.permute.xlu0 0
  %641 = vperm.xlu0 %640, %v637
  %v642 = vpop.permute.xlu0 %641
  %645 = vset.pattern.permute.xlu0 0
  %646 = vperm.xlu0 %645, %v638
  %v647 = vpop.permute.xlu0 %646
  %v650 = vsel %vm137, %v635, 0
  %v653 = vsel %vm137, %v636, 0
  %655 = vmatprep.subr.mxu0 0.0
  %656 = vmatpush1.msra.mxu0 %v631
  %657 = vmatprep.subr.mxu0 0.0
  %658 = vmatpush1.msra.mxu0 %v632
  %659 = vmatprep.subr.mxu0 0.0
  %660 = vmatpush1.msra.mxu0 %v633
  %661 = vmatprep.subr.mxu0 0.0
  %662 = vmatpush1.msra.mxu0 %v634
  %663 = vmatprep.subr.mxu0 0.0
  %664 = vmatpush1.msra.mxu0 0.0
  %665 = vmatprep.subr.mxu0 0.0
  %666 = vmatpush1.msra.mxu0 0.0
  %667 = vmatprep.subr.mxu0 0.0
  %668 = vmatpush1.msra.mxu0 0.0
  %669 = vmatprep.subr.mxu0 0.0
  %670 = vmatpush1.msra.mxu0 0.0
  %671 = vmatprep.subr.mxu0 0.0
  %672 = vmatpush1.msra.mxu0 0.0
  %673 = vmatprep.subr.mxu0 0.0
  %674 = vmatpush1.msra.mxu0 0.0
  %675 = vmatprep.subr.mxu0 0.0
  %676 = vmatpush1.msra.mxu0 0.0
  %677 = vmatprep.subr.mxu0 0.0
  %678 = vmatpush1.msra.mxu0 0.0
  %679 = vmatprep.subr.mxu0 0.0
  %680 = vmatpush1.msra.mxu0 0.0
  %681 = vmatprep.subr.mxu0 0.0
  %682 = vmatpush1.msra.mxu0 0.0
  %683 = vmatprep.subr.mxu0 0.0
  %684 = vmatpush1.msra.mxu0 0.0
  %685 = vmatprep.subr.mxu0 0.0
  %686 = vmatpush1.msra.mxu0 0.0
  %687 = vmatprep.subr.mxu0 0.0
  %688 = vmatpush1.msra.mxu0 0.0
  %689 = vmatprep.subr.mxu0 0.0
  %690 = vmatpush1.msra.mxu0 0.0
  %691 = vmatprep.subr.mxu0 0.0
  %692 = vmatpush1.msra.mxu0 0.0
  %693 = vmatprep.subr.mxu0 0.0
  %694 = vmatpush1.msra.mxu0 0.0
  %695 = vmatprep.subr.mxu0 0.0
  %696 = vmatpush1.msra.mxu0 0.0
  %697 = vmatprep.subr.mxu0 0.0
  %698 = vmatpush1.msra.mxu0 0.0
  %699 = vmatprep.subr.mxu0 0.0
  %700 = vmatpush1.msra.mxu0 0.0
  %701 = vmatprep.subr.mxu0 0.0
  %702 = vmatpush1.msra.mxu0 0.0
  %703 = vmatprep.subr.mxu0 0.0
  %704 = vmatpush1.msra.mxu0 0.0
  %705 = vmatprep.subr.mxu0 0.0
  %706 = vmatpush1.msra.mxu0 0.0
  %707 = vmatprep.subr.mxu0 0.0
  %708 = vmatpush1.msra.mxu0 0.0
  %709 = vmatprep.subr.mxu0 0.0
  %710 = vmatpush1.msra.mxu0 0.0
  %711 = vmatprep.subr.mxu0 0.0
  %712 = vmatpush1.msra.mxu0 0.0
  %713 = vmatprep.subr.mxu0 0.0
  %714 = vmatpush1.msra.mxu0 0.0
  %715 = vmatprep.subr.mxu0 0.0
  %716 = vmatpush1.msra.mxu0 0.0
  %717 = vmatprep.subr.mxu0 0.0
  %718 = vmatpush1.msra.mxu0 0.0
  %719 = vmatprep.mubr.f32.mxu0 0.0
  %720 = vmatmul.mubr.f32.gmra.mrb[0].mxu0 %v650
  %v721 = vpop.f32.mrb[0].mxu0
  %v722 = vadd.f32 %v642, %v721
  %v723 = vpop.f32.mrb[0].mxu0
  %724 = vmatprep.mubr.f32.mxu0 0.0
  %725 = vmatmul.mubr.f32.gmra.mrb[0].mxu0 %v653
  %v726 = vpop.f32.mrb[0].mxu0
  %v727 = vadd.f32 %v647, %v726
  %v728 = vpop.f32.mrb[0].mxu0
  %729 = vdwg.mxu0
  %vm730 = vcmask 15360
  %731 = vst.msk [vmem:[%s8] sm:$0xff] %vm730, %v722
  %vm732 = vcmask 9216
  %733 = vst.msk [vmem:[%s8 + $0x8] sm:$0x3] %vm732, %v727
  // Predicated region
  $region34: #{basic_cnn_forward.5} parent=0 // pred_check
    _
  $region35: #{basic_cnn_forward.5} parent=0 // pred_check_branch
    %735 = sbr.rel (0) target = $region37
  $region36: #{basic_cnn_forward.5} parent=0 // pred_region
    _
  $region37: #{basic_cnn_forward.5} parent=0 // pred_fallthru
    _
  // Predicated region
  $region38: #{basic_cnn_forward.5} parent=0 // pred_check
    _
  $region39: #{basic_cnn_forward.5} parent=0 // pred_check_branch
    %737 = sbr.rel (0) target = $region41
  $region40: #{basic_cnn_forward.5} parent=0 // pred_region
    _
  $region41: #{basic_cnn_forward.5} parent=0 // pred_fallthru
    _

</llo_original>
